<compile_context>
chip_gen: v5e
topology: v5e:2x2
jax: 0.10.0
libtpu: 0.0.40
codegen_flags: <defaults>
</compile_context>

<pallas_src>
import functools
import math

import jax
import jax.numpy as jnp
import numpy as np
from jax.experimental import pallas as pl
from jax.experimental.pallas import tpu as pltpu

LEAK = 0.2
EPS = 1e-5
INV_SQRT2 = 1.0 / math.sqrt(2.0)


# ----------------------------- fused Pallas kernel ---------------------------

def _resblk_kernel(x_ref, w1_ref, w2_ref, wsc_ref, pv_ref, mf_ref, mh_ref,
                   bmf_ref, bmh_ref, pool_ref, o_ref, im1_ref, im2_ref,
                   *, B, H, W):
    Cp = x_ref.shape[0]                      # padded channel count (multiple of 8)
    Cout = o_ref.shape[0]
    L = H * W
    Hh, Wh = H // 2, W // 2
    Lh = Hh * Wh
    NF = B * L                               # full-res lanes (batch folded in)
    NH = B * Lh                              # half-res lanes

    # packed per-channel params: [bias1, g1, be1, g2, be2, bias2]
    pv = pv_ref[...].astype(jnp.float32)                         # (Cp, 6)
    bias1, g1, be1 = pv[:, 0:1], pv[:, 1:2], pv[:, 2:3]
    g2, be2 = pv[:, 3:4], pv[:, 4:5]
    bias2 = pv[:Cout, 5:6]

    def inorm_lrelu(y, gamma, beta, bmask, inv_n):
        # InstanceNorm (biased var, per image/channel) + affine + LeakyReLU(0.2).
        # Stats via one fused sum / sum-of-squares pass per image (batch masks).
        y2 = y * y
        scale = jnp.zeros_like(y)
        shift = jnp.zeros_like(y)
        for b in range(B):
            m = bmask[b:b + 1, :]                                  # (1, N)
            mean = jnp.sum(y * m, axis=1, keepdims=True) * inv_n   # (C, 1)
            ex2 = jnp.sum(y2 * m, axis=1, keepdims=True) * inv_n
            var = jnp.maximum(ex2 - mean * mean, 0.0)
            sc = gamma * jax.lax.rsqrt(var + EPS)
            sh = beta - mean * sc
            scale = scale + sc * m
            shift = shift + sh * m
        out = y * scale + shift
        return jnp.where(out >= 0, out, LEAK * out)

    def conv3x3(y, w_packed, bias, masks_ref, im_ref, width, nlanes):
        # SAME 3x3 conv: shifted copies via lane rolls + precomputed zero-pad
        # masks, stacked into a (9*Cp, N) im2col scratch (tile-aligned stores),
        # then a single MXU contraction.  Shifts never leak across images: any
        # position whose source lies outside its own image is masked to zero.
        for t in range(9):
            dy, dx = t // 3 - 1, t % 3 - 1
            sh = (-(dy * width + dx)) % nlanes
            shifted = pltpu.roll(y, sh, axis=1) if sh else y
            im_ref[pl.ds(t * Cp, Cp), :] = shifted * masks_ref[pl.ds(t, 1), :]
        out = jnp.dot(w_packed, im_ref[...], preferred_element_type=jnp.float32)
        return out + bias

    x = x_ref[...].astype(jnp.float32)                            # (Cp, NF)
    bmf = bmf_ref[...]
    bmh = bmh_ref[...]
    pool = pool_ref[...]                                          # (NF, NH)

    # residual: norm1 -> actv -> conv1 -> avgpool -> norm2 -> actv -> conv2
    y = inorm_lrelu(x, g1, be1, bmf, 1.0 / L)
    r = conv3x3(y, w1_ref[...].astype(jnp.float32), bias1, mf_ref, im1_ref, W, NF)
    r = jnp.dot(r, pool, preferred_element_type=jnp.float32)      # (Cp, NH)
    r = inorm_lrelu(r, g2, be2, bmh, 1.0 / Lh)
    r = conv3x3(r, w2_ref[...].astype(jnp.float32), bias2, mh_ref, im2_ref, Wh, NH)

    # shortcut: pool first (commutes with the bias-free 1x1 conv), then 1x1 conv
    s = jnp.dot(x, pool, preferred_element_type=jnp.float32)      # (Cp, NH)
    s = jnp.dot(wsc_ref[...].astype(jnp.float32), s,
                preferred_element_type=jnp.float32)               # (Cout, NH)

    o_ref[...] = ((r + s) * INV_SQRT2).astype(o_ref.dtype)        # lane-dense store


# ----------------------------- host-side constants ---------------------------

def _build_constants(B, H, W):
    """numpy-precomputed pooling matrix, conv boundary masks and batch masks."""
    L = H * W
    Hh, Wh = H // 2, W // 2
    Lh = Hh * Wh

    q = np.arange(B * L)
    b = q // L
    h = (q % L) // W
    w = q % W

    pool = np.zeros((B * L, B * Lh), np.float32)
    pool[q, b * Lh + (h // 2) * Wh + (w // 2)] = 0.25              # 2x2 avg pool

    def tap_masks(Hc, Wc):
        qq = np.arange(B * Hc * Wc)
        hh = (qq % (Hc * Wc)) // Wc
        ww = qq % Wc
        m = np.zeros((9, qq.size), np.float32)
        for t in range(9):
            dy, dx = t // 3 - 1, t % 3 - 1
            m[t] = ((hh + dy >= 0) & (hh + dy < Hc) &
                    (ww + dx >= 0) & (ww + dx < Wc)).astype(np.float32)
        return m

    mf = tap_masks(H, W)                                           # (9, B*L)
    mh = tap_masks(Hh, Wh)                                         # (9, B*Lh)

    bmf = (np.arange(B)[:, None] == b[None, :]).astype(np.float32)             # (B, B*L)
    qh = np.arange(B * Lh)
    bmh = (np.arange(B)[:, None] == (qh // Lh)[None, :]).astype(np.float32)    # (B, B*Lh)
    return pool, mf, mh, bmf, bmh


# ----------------------------- wrapper ---------------------------------------

def resblk_forward(x_nchw, p):
    """normalize=True, downsample=True, learned_sc=True, feature=False."""
    B, Cin, H, W = x_nchw.shape
    Cout = p["w2"].shape[-1]
    Hh, Wh = H // 2, W // 2
    Cp = ((max(Cin, 8) + 7) // 8) * 8        # pad channels to a full sublane tile

    pool, mf, mh, bmf, bmh = _build_constants(B, H, W)

    # activations: channel-major, batch folded into the lane axis -> (Cp, B*H*W)
    x_flat = x_nchw.transpose(1, 0, 2, 3).reshape(Cin, B * H * W)
    x_flat = jnp.pad(x_flat, ((0, Cp - Cin), (0, 0)))

    # conv weights packed for one (O, 9*Cp) @ (9*Cp, N) contraction per conv
    def pack_conv(w):                        # HWIO (3, 3, I, O)
        o = w.shape[-1]
        wt = jnp.transpose(w, (3, 0, 1, 2))                       # (O, 3, 3, I)
        wt = jnp.pad(wt, ((0, 0), (0, 0), (0, 0), (0, Cp - w.shape[2])))
        return wt.reshape(o, 9 * Cp)

    w1p = jnp.pad(pack_conv(p["w1"]), ((0, Cp - p["w1"].shape[-1]), (0, 0)))   # (Cp, 9Cp)
    w2p = pack_conv(p["w2"])                                                    # (Cout, 9Cp)
    wscp = jnp.pad(p["wsc"].T, ((0, 0), (0, Cp - Cin)))                         # (Cout, Cp)

    def padc(v):                              # (c, 1) -> (Cp, 1), zero-padded
        return jnp.pad(v, ((0, Cp - v.shape[0]), (0, 0)))

    pvec = jnp.concatenate(
        [padc(p["bias1"]), padc(p["g1"]), padc(p["b1"]),
         padc(p["g2"]), padc(p["b2"]), padc(p["bias2"])], axis=1)               # (Cp, 6)

    kernel = functools.partial(_resblk_kernel, B=B, H=H, W=W)
    vmem = pl.BlockSpec(memory_space=pltpu.MemorySpace.VMEM)
    out = pl.pallas_call(
        kernel,
        out_shape=jax.ShapeDtypeStruct((Cout, B * Hh * Wh), x_nchw.dtype),
        in_specs=[vmem] * 10,
        out_specs=vmem,
        scratch_shapes=[pltpu.VMEM((9 * Cp, B * H * W), jnp.float32),    # im2col full res
                        pltpu.VMEM((9 * Cp, B * Hh * Wh), jnp.float32)], # im2col half res
    )(x_flat, w1p, w2p, wscp, pvec, mf, mh, bmf, bmh, pool)

    # lane-dense (Cout, B*Hh*Wh) kernel output -> NCHW
    return out.reshape(Cout, B, Hh, Wh).transpose(1, 0, 2, 3)


# ----------------------------- pure-JAX reference ----------------------------

def ref_resblk(x, p):   # x: (B, C, H, W), NCHW like PyTorch
    def inorm(y, g, b):
        m = y.mean(axis=(2, 3), keepdims=True)
        v = ((y - m) ** 2).mean(axis=(2, 3), keepdims=True)
        return (y - m) * jax.lax.rsqrt(v + EPS) * g.reshape(1, -1, 1, 1) + b.reshape(1, -1, 1, 1)

    def lrelu(y):
        return jnp.where(y >= 0, y, LEAK * y)

    def conv3(y, w, bias):
        out = jax.lax.conv_general_dilated(y, w, (1, 1), "SAME",
                                           dimension_numbers=("NCHW", "HWIO", "NCHW"))
        return out + bias.reshape(1, -1, 1, 1)

    def pool(y):
        b, c, h, w = y.shape
        return y.reshape(b, c, h // 2, 2, w // 2, 2).mean(axis=(3, 5))

    r = lrelu(inorm(x, p["g1"], p["b1"]))
    r = pool(conv3(r, p["w1"], p["bias1"]))
    r = lrelu(inorm(r, p["g2"], p["b2"]))
    r = conv3(r, p["w2"], p["bias2"])
    s = pool(jnp.einsum("bchw,co->bohw", x, p["wsc"]))
    return (s + r) * INV_SQRT2


# ----------------------------- main -------------------------------------------

if __name__ == "__main__":
    B, Cin, Cout, H, W = 2, 4, 8, 16, 16
    key = jax.random.PRNGKey(0)
    ks = jax.random.split(key, 10)

    def uinit(k, shape, fan_in):
        bound = 1.0 / np.sqrt(fan_in)
        return jax.random.uniform(k, shape, jnp.float32, -bound, bound)

    params = {
        # conv1: Conv2d(Cin, Cin, 3, 1, 1) -- HWIO
        "w1": uinit(ks[0], (3, 3, Cin, Cin), 9 * Cin),
        "bias1": uinit(ks[1], (Cin, 1), 9 * Cin),
        # conv2: Conv2d(Cin, Cout, 3, 1, 1) -- HWIO
        "w2": uinit(ks[2], (3, 3, Cin, Cout), 9 * Cin),
        "bias2": uinit(ks[3], (Cout, 1), 9 * Cin),
        # conv1x1: Conv2d(Cin, Cout, 1, bias=False) -- (Cin, Cout)
        "wsc": uinit(ks[4], (Cin, Cout), Cin),
        # InstanceNorm2d affine params (perturbed so the affine path is exercised)
        "g1": 1.0 + 0.1 * jax.random.normal(ks[5], (Cin, 1), jnp.float32),
        "b1": 0.1 * jax.random.normal(ks[6], (Cin, 1), jnp.float32),
        "g2": 1.0 + 0.1 * jax.random.normal(ks[7], (Cin, 1), jnp.float32),
        "b2": 0.1 * jax.random.normal(ks[8], (Cin, 1), jnp.float32),
    }

    x = jax.random.normal(ks[9], (B, Cin, H, W), jnp.float32)   # NCHW (PyTorch layout)

    out = jax.jit(resblk_forward)(x, params)
    out = jax.block_until_ready(out)

    ref = ref_resblk(x, params)
    np.testing.assert_allclose(np.asarray(out), np.asarray(ref), rtol=2e-4, atol=2e-4)
    print("KERNEL_OK")
</pallas_src>

<mosaic_0001>
module attributes {stable_mosaic.version = 11 : i64} {
  func.func @_resblk_kernel(%arg0: memref<8x512xf32, #tpu.memory_space<vmem>>, %arg1: memref<8x72xf32, #tpu.memory_space<vmem>>, %arg2: memref<8x72xf32, #tpu.memory_space<vmem>>, %arg3: memref<8x8xf32, #tpu.memory_space<vmem>>, %arg4: memref<8x6xf32, #tpu.memory_space<vmem>>, %arg5: memref<9x512xf32, #tpu.memory_space<vmem>>, %arg6: memref<9x128xf32, #tpu.memory_space<vmem>>, %arg7: memref<2x512xf32, #tpu.memory_space<vmem>>, %arg8: memref<2x128xf32, #tpu.memory_space<vmem>>, %arg9: memref<512x128xf32, #tpu.memory_space<vmem>>, %arg10: memref<8x128xf32, #tpu.memory_space<vmem>>, %arg11: memref<72x512xf32, #tpu.memory_space<vmem>>, %arg12: memref<72x128xf32, #tpu.memory_space<vmem>>) attributes {dimension_semantics = [], scalar_prefetch = 0 : i64, scratch_operands = 2 : i64, tpu.core_type = #tpu.core_type<tc>} {
    %c0 = arith.constant 0 : index
    %c0_0 = arith.constant 0 : index
    %0 = vector.load %arg4[%c0, %c0_0] : memref<8x6xf32, #tpu.memory_space<vmem>>, vector<8x6xf32>
    %1 = vector.extract_strided_slice %0 {offsets = [0, 0], sizes = [8, 1], strides = [1, 1]} : vector<8x6xf32> to vector<8x1xf32>
    %2 = vector.extract_strided_slice %0 {offsets = [0, 1], sizes = [8, 1], strides = [1, 1]} : vector<8x6xf32> to vector<8x1xf32>
    %3 = vector.extract_strided_slice %0 {offsets = [0, 2], sizes = [8, 1], strides = [1, 1]} : vector<8x6xf32> to vector<8x1xf32>
    %4 = vector.extract_strided_slice %0 {offsets = [0, 3], sizes = [8, 1], strides = [1, 1]} : vector<8x6xf32> to vector<8x1xf32>
    %5 = vector.extract_strided_slice %0 {offsets = [0, 4], sizes = [8, 1], strides = [1, 1]} : vector<8x6xf32> to vector<8x1xf32>
    %6 = vector.extract_strided_slice %0 {offsets = [0, 5], sizes = [8, 1], strides = [1, 1]} : vector<8x6xf32> to vector<8x1xf32>
    %c0_1 = arith.constant 0 : index
    %c0_2 = arith.constant 0 : index
    %7 = vector.load %arg0[%c0_1, %c0_2] : memref<8x512xf32, #tpu.memory_space<vmem>>, vector<8x512xf32>
    %c0_3 = arith.constant 0 : index
    %c0_4 = arith.constant 0 : index
    %8 = vector.load %arg7[%c0_3, %c0_4] : memref<2x512xf32, #tpu.memory_space<vmem>>, vector<2x512xf32>
    %c0_5 = arith.constant 0 : index
    %c0_6 = arith.constant 0 : index
    %9 = vector.load %arg8[%c0_5, %c0_6] : memref<2x128xf32, #tpu.memory_space<vmem>>, vector<2x128xf32>
    %c0_7 = arith.constant 0 : index
    %c0_8 = arith.constant 0 : index
    %10 = vector.load %arg9[%c0_7, %c0_8] : memref<512x128xf32, #tpu.memory_space<vmem>>, vector<512x128xf32>
    %11 = arith.mulf %7, %7 : vector<8x512xf32>
    %cst = arith.constant 0.000000e+00 : f32
    %12 = vector.broadcast %cst : f32 to vector<8x512xf32>
    %cst_9 = arith.constant 0.000000e+00 : f32
    %13 = vector.broadcast %cst_9 : f32 to vector<8x512xf32>
    %14 = vector.extract_strided_slice %8 {offsets = [0, 0], sizes = [1, 512], strides = [1, 1]} : vector<2x512xf32> to vector<1x512xf32>
    %15 = vector.broadcast %14 : vector<1x512xf32> to vector<8x512xf32>
    %16 = arith.mulf %7, %15 : vector<8x512xf32>
    %cst_10 = arith.constant dense<0.000000e+00> : vector<8xf32>
    %17 = vector.multi_reduction <add>, %16, %cst_10 [1] : vector<8x512xf32> to vector<8xf32>
    %18 = vector.shape_cast %17 : vector<8xf32> to vector<8x1xf32>
    %cst_11 = arith.constant 3.906250e-03 : f32
    %19 = vector.broadcast %cst_11 : f32 to vector<8x1xf32>
    %20 = arith.mulf %18, %19 : vector<8x1xf32>
    %21 = vector.broadcast %14 : vector<1x512xf32> to vector<8x512xf32>
    %22 = arith.mulf %11, %21 : vector<8x512xf32>
    %cst_12 = arith.constant dense<0.000000e+00> : vector<8xf32>
    %23 = vector.multi_reduction <add>, %22, %cst_12 [1] : vector<8x512xf32> to vector<8xf32>
    %24 = vector.shape_cast %23 : vector<8xf32> to vector<8x1xf32>
    %cst_13 = arith.constant 3.906250e-03 : f32
    %25 = vector.broadcast %cst_13 : f32 to vector<8x1xf32>
    %26 = arith.mulf %24, %25 : vector<8x1xf32>
    %27 = arith.mulf %20, %20 : vector<8x1xf32>
    %28 = arith.subf %26, %27 : vector<8x1xf32>
    %cst_14 = arith.constant 0.000000e+00 : f32
    %29 = vector.broadcast %cst_14 : f32 to vector<8x1xf32>
    %30 = arith.maximumf %28, %29 : vector<8x1xf32>
    %cst_15 = arith.constant 9.99999974E-6 : f32
    %31 = vector.broadcast %cst_15 : f32 to vector<8x1xf32>
    %32 = arith.addf %30, %31 : vector<8x1xf32>
    %33 = math.rsqrt %32 : vector<8x1xf32>
    %34 = arith.mulf %2, %33 : vector<8x1xf32>
    %35 = arith.mulf %20, %34 : vector<8x1xf32>
    %36 = arith.subf %3, %35 : vector<8x1xf32>
    %37 = vector.broadcast %34 : vector<8x1xf32> to vector<8x512xf32>
    %38 = vector.broadcast %14 : vector<1x512xf32> to vector<8x512xf32>
    %39 = arith.mulf %37, %38 : vector<8x512xf32>
    %40 = arith.addf %12, %39 : vector<8x512xf32>
    %41 = vector.broadcast %36 : vector<8x1xf32> to vector<8x512xf32>
    %42 = vector.broadcast %14 : vector<1x512xf32> to vector<8x512xf32>
    %43 = arith.mulf %41, %42 : vector<8x512xf32>
    %44 = arith.addf %13, %43 : vector<8x512xf32>
    %45 = vector.extract_strided_slice %8 {offsets = [1, 0], sizes = [1, 512], strides = [1, 1]} : vector<2x512xf32> to vector<1x512xf32>
    %46 = vector.broadcast %45 : vector<1x512xf32> to vector<8x512xf32>
    %47 = arith.mulf %7, %46 : vector<8x512xf32>
    %cst_16 = arith.constant dense<0.000000e+00> : vector<8xf32>
    %48 = vector.multi_reduction <add>, %47, %cst_16 [1] : vector<8x512xf32> to vector<8xf32>
    %49 = vector.shape_cast %48 : vector<8xf32> to vector<8x1xf32>
    %cst_17 = arith.constant 3.906250e-03 : f32
    %50 = vector.broadcast %cst_17 : f32 to vector<8x1xf32>
    %51 = arith.mulf %49, %50 : vector<8x1xf32>
    %52 = vector.broadcast %45 : vector<1x512xf32> to vector<8x512xf32>
    %53 = arith.mulf %11, %52 : vector<8x512xf32>
    %cst_18 = arith.constant dense<0.000000e+00> : vector<8xf32>
    %54 = vector.multi_reduction <add>, %53, %cst_18 [1] : vector<8x512xf32> to vector<8xf32>
    %55 = vector.shape_cast %54 : vector<8xf32> to vector<8x1xf32>
    %cst_19 = arith.constant 3.906250e-03 : f32
    %56 = vector.broadcast %cst_19 : f32 to vector<8x1xf32>
    %57 = arith.mulf %55, %56 : vector<8x1xf32>
    %58 = arith.mulf %51, %51 : vector<8x1xf32>
    %59 = arith.subf %57, %58 : vector<8x1xf32>
    %cst_20 = arith.constant 0.000000e+00 : f32
    %60 = vector.broadcast %cst_20 : f32 to vector<8x1xf32>
    %61 = arith.maximumf %59, %60 : vector<8x1xf32>
    %cst_21 = arith.constant 9.99999974E-6 : f32
    %62 = vector.broadcast %cst_21 : f32 to vector<8x1xf32>
    %63 = arith.addf %61, %62 : vector<8x1xf32>
    %64 = math.rsqrt %63 : vector<8x1xf32>
    %65 = arith.mulf %2, %64 : vector<8x1xf32>
    %66 = arith.mulf %51, %65 : vector<8x1xf32>
    %67 = arith.subf %3, %66 : vector<8x1xf32>
    %68 = vector.broadcast %65 : vector<8x1xf32> to vector<8x512xf32>
    %69 = vector.broadcast %45 : vector<1x512xf32> to vector<8x512xf32>
    %70 = arith.mulf %68, %69 : vector<8x512xf32>
    %71 = arith.addf %40, %70 : vector<8x512xf32>
    %72 = vector.broadcast %67 : vector<8x1xf32> to vector<8x512xf32>
    %73 = vector.broadcast %45 : vector<1x512xf32> to vector<8x512xf32>
    %74 = arith.mulf %72, %73 : vector<8x512xf32>
    %75 = arith.addf %44, %74 : vector<8x512xf32>
    %76 = arith.mulf %7, %71 : vector<8x512xf32>
    %77 = arith.addf %76, %75 : vector<8x512xf32>
    %cst_22 = arith.constant 0.000000e+00 : f32
    %78 = vector.broadcast %cst_22 : f32 to vector<8x512xf32>
    %79 = arith.cmpf oge, %77, %78 : vector<8x512xf32>
    %cst_23 = arith.constant 2.000000e-01 : f32
    %80 = vector.broadcast %cst_23 : f32 to vector<8x512xf32>
    %81 = arith.mulf %80, %77 : vector<8x512xf32>
    %82 = arith.select %79, %77, %81 : vector<8x512xi1>, vector<8x512xf32>
    %c0_24 = arith.constant 0 : index
    %c0_25 = arith.constant 0 : index
    %83 = vector.load %arg1[%c0_24, %c0_25] : memref<8x72xf32, #tpu.memory_space<vmem>>, vector<8x72xf32>
    %c17_i32 = arith.constant 17 : i32
    %84 = tpu.dynamic_rotate %82 by %c17_i32 dim 1 : vector<8x512xf32>, i32 -> vector<8x512xf32>
    %c0_26 = arith.constant 0 : index
    %c0_27 = arith.constant 0 : index
    %85 = vector.load %arg5[%c0_26, %c0_27] : memref<9x512xf32, #tpu.memory_space<vmem>>, vector<1x512xf32>
    %86 = vector.broadcast %85 : vector<1x512xf32> to vector<8x512xf32>
    %87 = arith.mulf %84, %86 : vector<8x512xf32>
    %c0_28 = arith.constant 0 : index
    %c0_29 = arith.constant 0 : index
    %88 = vector.load %arg11[%c0_28, %c0_29] : memref<72x512xf32, #tpu.memory_space<vmem>>, vector<8x512xf32>
    tpu.vector_store %arg11[%c0_28, %c0_29], %87 {strides = array<i32>} : memref<72x512xf32, #tpu.memory_space<vmem>>, vector<8x512xf32>,
    %c16_i32 = arith.constant 16 : i32
    %89 = tpu.dynamic_rotate %82 by %c16_i32 dim 1 : vector<8x512xf32>, i32 -> vector<8x512xf32>
    %c1 = arith.constant 1 : index
    %c0_30 = arith.constant 0 : index
    %90 = vector.load %arg5[%c1, %c0_30] : memref<9x512xf32, #tpu.memory_space<vmem>>, vector<1x512xf32>
    %91 = vector.broadcast %90 : vector<1x512xf32> to vector<8x512xf32>
    %92 = arith.mulf %89, %91 : vector<8x512xf32>
    %c8 = arith.constant 8 : index
    %c0_31 = arith.constant 0 : index
    %93 = vector.load %arg11[%c8, %c0_31] : memref<72x512xf32, #tpu.memory_space<vmem>>, vector<8x512xf32>
    tpu.vector_store %arg11[%c8, %c0_31], %92 {strides = array<i32>} : memref<72x512xf32, #tpu.memory_space<vmem>>, vector<8x512xf32>,
    %c15_i32 = arith.constant 15 : i32
    %94 = tpu.dynamic_rotate %82 by %c15_i32 dim 1 : vector<8x512xf32>, i32 -> vector<8x512xf32>
    %c2 = arith.constant 2 : index
    %c0_32 = arith.constant 0 : index
    %95 = vector.load %arg5[%c2, %c0_32] : memref<9x512xf32, #tpu.memory_space<vmem>>, vector<1x512xf32>
    %96 = vector.broadcast %95 : vector<1x512xf32> to vector<8x512xf32>
    %97 = arith.mulf %94, %96 : vector<8x512xf32>
    %c16 = arith.constant 16 : index
    %c0_33 = arith.constant 0 : index
    %98 = vector.load %arg11[%c16, %c0_33] : memref<72x512xf32, #tpu.memory_space<vmem>>, vector<8x512xf32>
    tpu.vector_store %arg11[%c16, %c0_33], %97 {strides = array<i32>} : memref<72x512xf32, #tpu.memory_space<vmem>>, vector<8x512xf32>,
    %c1_i32 = arith.constant 1 : i32
    %99 = tpu.dynamic_rotate %82 by %c1_i32 dim 1 : vector<8x512xf32>, i32 -> vector<8x512xf32>
    %c3 = arith.constant 3 : index
    %c0_34 = arith.constant 0 : index
    %100 = vector.load %arg5[%c3, %c0_34] : memref<9x512xf32, #tpu.memory_space<vmem>>, vector<1x512xf32>
    %101 = vector.broadcast %100 : vector<1x512xf32> to vector<8x512xf32>
    %102 = arith.mulf %99, %101 : vector<8x512xf32>
    %c24 = arith.constant 24 : index
    %c0_35 = arith.constant 0 : index
    %103 = vector.load %arg11[%c24, %c0_35] : memref<72x512xf32, #tpu.memory_space<vmem>>, vector<8x512xf32>
    tpu.vector_store %arg11[%c24, %c0_35], %102 {strides = array<i32>} : memref<72x512xf32, #tpu.memory_space<vmem>>, vector<8x512xf32>,
    %c4 = arith.constant 4 : index
    %c0_36 = arith.constant 0 : index
    %104 = vector.load %arg5[%c4, %c0_36] : memref<9x512xf32, #tpu.memory_space<vmem>>, vector<1x512xf32>
    %105 = vector.broadcast %104 : vector<1x512xf32> to vector<8x512xf32>
    %106 = arith.mulf %82, %105 : vector<8x512xf32>
    %c32 = arith.constant 32 : index
    %c0_37 = arith.constant 0 : index
    %107 = vector.load %arg11[%c32, %c0_37] : memref<72x512xf32, #tpu.memory_space<vmem>>, vector<8x512xf32>
    tpu.vector_store %arg11[%c32, %c0_37], %106 {strides = array<i32>} : memref<72x512xf32, #tpu.memory_space<vmem>>, vector<8x512xf32>,
    %c511_i32 = arith.constant 511 : i32
    %108 = tpu.dynamic_rotate %82 by %c511_i32 dim 1 : vector<8x512xf32>, i32 -> vector<8x512xf32>
    %c5 = arith.constant 5 : index
    %c0_38 = arith.constant 0 : index
    %109 = vector.load %arg5[%c5, %c0_38] : memref<9x512xf32, #tpu.memory_space<vmem>>, vector<1x512xf32>
    %110 = vector.broadcast %109 : vector<1x512xf32> to vector<8x512xf32>
    %111 = arith.mulf %108, %110 : vector<8x512xf32>
    %c40 = arith.constant 40 : index
    %c0_39 = arith.constant 0 : index
    %112 = vector.load %arg11[%c40, %c0_39] : memref<72x512xf32, #tpu.memory_space<vmem>>, vector<8x512xf32>
    tpu.vector_store %arg11[%c40, %c0_39], %111 {strides = array<i32>} : memref<72x512xf32, #tpu.memory_space<vmem>>, vector<8x512xf32>,
    %c497_i32 = arith.constant 497 : i32
    %113 = tpu.dynamic_rotate %82 by %c497_i32 dim 1 : vector<8x512xf32>, i32 -> vector<8x512xf32>
    %c6 = arith.constant 6 : index
    %c0_40 = arith.constant 0 : index
    %114 = vector.load %arg5[%c6, %c0_40] : memref<9x512xf32, #tpu.memory_space<vmem>>, vector<1x512xf32>
    %115 = vector.broadcast %114 : vector<1x512xf32> to vector<8x512xf32>
    %116 = arith.mulf %113, %115 : vector<8x512xf32>
    %c48 = arith.constant 48 : index
    %c0_41 = arith.constant 0 : index
    %117 = vector.load %arg11[%c48, %c0_41] : memref<72x512xf32, #tpu.memory_space<vmem>>, vector<8x512xf32>
    tpu.vector_store %arg11[%c48, %c0_41], %116 {strides = array<i32>} : memref<72x512xf32, #tpu.memory_space<vmem>>, vector<8x512xf32>,
    %c496_i32 = arith.constant 496 : i32
    %118 = tpu.dynamic_rotate %82 by %c496_i32 dim 1 : vector<8x512xf32>, i32 -> vector<8x512xf32>
    %c7 = arith.constant 7 : index
    %c0_42 = arith.constant 0 : index
    %119 = vector.load %arg5[%c7, %c0_42] : memref<9x512xf32, #tpu.memory_space<vmem>>, vector<1x512xf32>
    %120 = vector.broadcast %119 : vector<1x512xf32> to vector<8x512xf32>
    %121 = arith.mulf %118, %120 : vector<8x512xf32>
    %c56 = arith.constant 56 : index
    %c0_43 = arith.constant 0 : index
    %122 = vector.load %arg11[%c56, %c0_43] : memref<72x512xf32, #tpu.memory_space<vmem>>, vector<8x512xf32>
    tpu.vector_store %arg11[%c56, %c0_43], %121 {strides = array<i32>} : memref<72x512xf32, #tpu.memory_space<vmem>>, vector<8x512xf32>,
    %c495_i32 = arith.constant 495 : i32
    %123 = tpu.dynamic_rotate %82 by %c495_i32 dim 1 : vector<8x512xf32>, i32 -> vector<8x512xf32>
    %c8_44 = arith.constant 8 : index
    %c0_45 = arith.constant 0 : index
    %124 = vector.load %arg5[%c8_44, %c0_45] : memref<9x512xf32, #tpu.memory_space<vmem>>, vector<1x512xf32>
    %125 = vector.broadcast %124 : vector<1x512xf32> to vector<8x512xf32>
    %126 = arith.mulf %123, %125 : vector<8x512xf32>
    %c64 = arith.constant 64 : index
    %c0_46 = arith.constant 0 : index
    %127 = vector.load %arg11[%c64, %c0_46] : memref<72x512xf32, #tpu.memory_space<vmem>>, vector<8x512xf32>
    tpu.vector_store %arg11[%c64, %c0_46], %126 {strides = array<i32>} : memref<72x512xf32, #tpu.memory_space<vmem>>, vector<8x512xf32>,
    %c0_47 = arith.constant 0 : index
    %c0_48 = arith.constant 0 : index
    %128 = vector.load %arg11[%c0_47, %c0_48] : memref<72x512xf32, #tpu.memory_space<vmem>>, vector<72x512xf32>
    %cst_49 = arith.constant dense<0.000000e+00> : vector<8x512xf32>
    %129 = tpu.matmul %83, %128, %cst_49 {dimension_numbers = #tpu.dot_dimension_numbers<[1], [0], [0], [1], [0, 0, 1, 1], [], []>} : vector<8x72xf32>, vector<72x512xf32>, vector<8x512xf32> -> vector<8x512xf32>
    %130 = vector.broadcast %1 : vector<8x1xf32> to vector<8x512xf32>
    %131 = arith.addf %129, %130 : vector<8x512xf32>
    %cst_50 = arith.constant dense<0.000000e+00> : vector<8x128xf32>
    %132 = tpu.matmul %131, %10, %cst_50 {dimension_numbers = #tpu.dot_dimension_numbers<[1], [0], [0], [1], [0, 0, 1, 1], [], []>} : vector<8x512xf32>, vector<512x128xf32>, vector<8x128xf32> -> vector<8x128xf32>
    %133 = arith.mulf %132, %132 : vector<8x128xf32>
    %cst_51 = arith.constant 0.000000e+00 : f32
    %134 = vector.broadcast %cst_51 : f32 to vector<8x128xf32>
    %cst_52 = arith.constant 0.000000e+00 : f32
    %135 = vector.broadcast %cst_52 : f32 to vector<8x128xf32>
    %136 = vector.extract_strided_slice %9 {offsets = [0, 0], sizes = [1, 128], strides = [1, 1]} : vector<2x128xf32> to vector<1x128xf32>
    %137 = vector.broadcast %136 : vector<1x128xf32> to vector<8x128xf32>
    %138 = arith.mulf %132, %137 : vector<8x128xf32>
    %cst_53 = arith.constant dense<0.000000e+00> : vector<8xf32>
    %139 = vector.multi_reduction <add>, %138, %cst_53 [1] : vector<8x128xf32> to vector<8xf32>
    %140 = vector.shape_cast %139 : vector<8xf32> to vector<8x1xf32>
    %cst_54 = arith.constant 1.562500e-02 : f32
    %141 = vector.broadcast %cst_54 : f32 to vector<8x1xf32>
    %142 = arith.mulf %140, %141 : vector<8x1xf32>
    %143 = vector.broadcast %136 : vector<1x128xf32> to vector<8x128xf32>
    %144 = arith.mulf %133, %143 : vector<8x128xf32>
    %cst_55 = arith.constant dense<0.000000e+00> : vector<8xf32>
    %145 = vector.multi_reduction <add>, %144, %cst_55 [1] : vector<8x128xf32> to vector<8xf32>
    %146 = vector.shape_cast %145 : vector<8xf32> to vector<8x1xf32>
    %cst_56 = arith.constant 1.562500e-02 : f32
    %147 = vector.broadcast %cst_56 : f32 to vector<8x1xf32>
    %148 = arith.mulf %146, %147 : vector<8x1xf32>
    %149 = arith.mulf %142, %142 : vector<8x1xf32>
    %150 = arith.subf %148, %149 : vector<8x1xf32>
    %cst_57 = arith.constant 0.000000e+00 : f32
    %151 = vector.broadcast %cst_57 : f32 to vector<8x1xf32>
    %152 = arith.maximumf %150, %151 : vector<8x1xf32>
    %cst_58 = arith.constant 9.99999974E-6 : f32
    %153 = vector.broadcast %cst_58 : f32 to vector<8x1xf32>
    %154 = arith.addf %152, %153 : vector<8x1xf32>
    %155 = math.rsqrt %154 : vector<8x1xf32>
    %156 = arith.mulf %4, %155 : vector<8x1xf32>
    %157 = arith.mulf %142, %156 : vector<8x1xf32>
    %158 = arith.subf %5, %157 : vector<8x1xf32>
    %159 = vector.broadcast %156 : vector<8x1xf32> to vector<8x128xf32>
    %160 = vector.broadcast %136 : vector<1x128xf32> to vector<8x128xf32>
    %161 = arith.mulf %159, %160 : vector<8x128xf32>
    %162 = arith.addf %134, %161 : vector<8x128xf32>
    %163 = vector.broadcast %158 : vector<8x1xf32> to vector<8x128xf32>
    %164 = vector.broadcast %136 : vector<1x128xf32> to vector<8x128xf32>
    %165 = arith.mulf %163, %164 : vector<8x128xf32>
    %166 = arith.addf %135, %165 : vector<8x128xf32>
    %167 = vector.extract_strided_slice %9 {offsets = [1, 0], sizes = [1, 128], strides = [1, 1]} : vector<2x128xf32> to vector<1x128xf32>
    %168 = vector.broadcast %167 : vector<1x128xf32> to vector<8x128xf32>
    %169 = arith.mulf %132, %168 : vector<8x128xf32>
    %cst_59 = arith.constant dense<0.000000e+00> : vector<8xf32>
    %170 = vector.multi_reduction <add>, %169, %cst_59 [1] : vector<8x128xf32> to vector<8xf32>
    %171 = vector.shape_cast %170 : vector<8xf32> to vector<8x1xf32>
    %cst_60 = arith.constant 1.562500e-02 : f32
    %172 = vector.broadcast %cst_60 : f32 to vector<8x1xf32>
    %173 = arith.mulf %171, %172 : vector<8x1xf32>
    %174 = vector.broadcast %167 : vector<1x128xf32> to vector<8x128xf32>
    %175 = arith.mulf %133, %174 : vector<8x128xf32>
    %cst_61 = arith.constant dense<0.000000e+00> : vector<8xf32>
    %176 = vector.multi_reduction <add>, %175, %cst_61 [1] : vector<8x128xf32> to vector<8xf32>
    %177 = vector.shape_cast %176 : vector<8xf32> to vector<8x1xf32>
    %cst_62 = arith.constant 1.562500e-02 : f32
    %178 = vector.broadcast %cst_62 : f32 to vector<8x1xf32>
    %179 = arith.mulf %177, %178 : vector<8x1xf32>
    %180 = arith.mulf %173, %173 : vector<8x1xf32>
    %181 = arith.subf %179, %180 : vector<8x1xf32>
    %cst_63 = arith.constant 0.000000e+00 : f32
    %182 = vector.broadcast %cst_63 : f32 to vector<8x1xf32>
    %183 = arith.maximumf %181, %182 : vector<8x1xf32>
    %cst_64 = arith.constant 9.99999974E-6 : f32
    %184 = vector.broadcast %cst_64 : f32 to vector<8x1xf32>
    %185 = arith.addf %183, %184 : vector<8x1xf32>
    %186 = math.rsqrt %185 : vector<8x1xf32>
    %187 = arith.mulf %4, %186 : vector<8x1xf32>
    %188 = arith.mulf %173, %187 : vector<8x1xf32>
    %189 = arith.subf %5, %188 : vector<8x1xf32>
    %190 = vector.broadcast %187 : vector<8x1xf32> to vector<8x128xf32>
    %191 = vector.broadcast %167 : vector<1x128xf32> to vector<8x128xf32>
    %192 = arith.mulf %190, %191 : vector<8x128xf32>
    %193 = arith.addf %162, %192 : vector<8x128xf32>
    %194 = vector.broadcast %189 : vector<8x1xf32> to vector<8x128xf32>
    %195 = vector.broadcast %167 : vector<1x128xf32> to vector<8x128xf32>
    %196 = arith.mulf %194, %195 : vector<8x128xf32>
    %197 = arith.addf %166, %196 : vector<8x128xf32>
    %198 = arith.mulf %132, %193 : vector<8x128xf32>
    %199 = arith.addf %198, %197 : vector<8x128xf32>
    %cst_65 = arith.constant 0.000000e+00 : f32
    %200 = vector.broadcast %cst_65 : f32 to vector<8x128xf32>
    %201 = arith.cmpf oge, %199, %200 : vector<8x128xf32>
    %cst_66 = arith.constant 2.000000e-01 : f32
    %202 = vector.broadcast %cst_66 : f32 to vector<8x128xf32>
    %203 = arith.mulf %202, %199 : vector<8x128xf32>
    %204 = arith.select %201, %199, %203 : vector<8x128xi1>, vector<8x128xf32>
    %c0_67 = arith.constant 0 : index
    %c0_68 = arith.constant 0 : index
    %205 = vector.load %arg2[%c0_67, %c0_68] : memref<8x72xf32, #tpu.memory_space<vmem>>, vector<8x72xf32>
    %c9_i32 = arith.constant 9 : i32
    %206 = tpu.dynamic_rotate %204 by %c9_i32 dim 1 : vector<8x128xf32>, i32 -> vector<8x128xf32>
    %c0_69 = arith.constant 0 : index
    %c0_70 = arith.constant 0 : index
    %207 = vector.load %arg6[%c0_69, %c0_70] : memref<9x128xf32, #tpu.memory_space<vmem>>, vector<1x128xf32>
    %208 = vector.broadcast %207 : vector<1x128xf32> to vector<8x128xf32>
    %209 = arith.mulf %206, %208 : vector<8x128xf32>
    %c0_71 = arith.constant 0 : index
    %c0_72 = arith.constant 0 : index
    %210 = vector.load %arg12[%c0_71, %c0_72] : memref<72x128xf32, #tpu.memory_space<vmem>>, vector<8x128xf32>
    tpu.vector_store %arg12[%c0_71, %c0_72], %209 {strides = array<i32>} : memref<72x128xf32, #tpu.memory_space<vmem>>, vector<8x128xf32>,
    %c8_i32 = arith.constant 8 : i32
    %211 = tpu.dynamic_rotate %204 by %c8_i32 dim 1 : vector<8x128xf32>, i32 -> vector<8x128xf32>
    %c1_73 = arith.constant 1 : index
    %c0_74 = arith.constant 0 : index
    %212 = vector.load %arg6[%c1_73, %c0_74] : memref<9x128xf32, #tpu.memory_space<vmem>>, vector<1x128xf32>
    %213 = vector.broadcast %212 : vector<1x128xf32> to vector<8x128xf32>
    %214 = arith.mulf %211, %213 : vector<8x128xf32>
    %c8_75 = arith.constant 8 : index
    %c0_76 = arith.constant 0 : index
    %215 = vector.load %arg12[%c8_75, %c0_76] : memref<72x128xf32, #tpu.memory_space<vmem>>, vector<8x128xf32>
    tpu.vector_store %arg12[%c8_75, %c0_76], %214 {strides = array<i32>} : memref<72x128xf32, #tpu.memory_space<vmem>>, vector<8x128xf32>,
    %c7_i32 = arith.constant 7 : i32
    %216 = tpu.dynamic_rotate %204 by %c7_i32 dim 1 : vector<8x128xf32>, i32 -> vector<8x128xf32>
    %c2_77 = arith.constant 2 : index
    %c0_78 = arith.constant 0 : index
    %217 = vector.load %arg6[%c2_77, %c0_78] : memref<9x128xf32, #tpu.memory_space<vmem>>, vector<1x128xf32>
    %218 = vector.broadcast %217 : vector<1x128xf32> to vector<8x128xf32>
    %219 = arith.mulf %216, %218 : vector<8x128xf32>
    %c16_79 = arith.constant 16 : index
    %c0_80 = arith.constant 0 : index
    %220 = vector.load %arg12[%c16_79, %c0_80] : memref<72x128xf32, #tpu.memory_space<vmem>>, vector<8x128xf32>
    tpu.vector_store %arg12[%c16_79, %c0_80], %219 {strides = array<i32>} : memref<72x128xf32, #tpu.memory_space<vmem>>, vector<8x128xf32>,
    %c1_i32_81 = arith.constant 1 : i32
    %221 = tpu.dynamic_rotate %204 by %c1_i32_81 dim 1 : vector<8x128xf32>, i32 -> vector<8x128xf32>
    %c3_82 = arith.constant 3 : index
    %c0_83 = arith.constant 0 : index
    %222 = vector.load %arg6[%c3_82, %c0_83] : memref<9x128xf32, #tpu.memory_space<vmem>>, vector<1x128xf32>
    %223 = vector.broadcast %222 : vector<1x128xf32> to vector<8x128xf32>
    %224 = arith.mulf %221, %223 : vector<8x128xf32>
    %c24_84 = arith.constant 24 : index
    %c0_85 = arith.constant 0 : index
    %225 = vector.load %arg12[%c24_84, %c0_85] : memref<72x128xf32, #tpu.memory_space<vmem>>, vector<8x128xf32>
    tpu.vector_store %arg12[%c24_84, %c0_85], %224 {strides = array<i32>} : memref<72x128xf32, #tpu.memory_space<vmem>>, vector<8x128xf32>,
    %c4_86 = arith.constant 4 : index
    %c0_87 = arith.constant 0 : index
    %226 = vector.load %arg6[%c4_86, %c0_87] : memref<9x128xf32, #tpu.memory_space<vmem>>, vector<1x128xf32>
    %227 = vector.broadcast %226 : vector<1x128xf32> to vector<8x128xf32>
    %228 = arith.mulf %204, %227 : vector<8x128xf32>
    %c32_88 = arith.constant 32 : index
    %c0_89 = arith.constant 0 : index
    %229 = vector.load %arg12[%c32_88, %c0_89] : memref<72x128xf32, #tpu.memory_space<vmem>>, vector<8x128xf32>
    tpu.vector_store %arg12[%c32_88, %c0_89], %228 {strides = array<i32>} : memref<72x128xf32, #tpu.memory_space<vmem>>, vector<8x128xf32>,
    %c127_i32 = arith.constant 127 : i32
    %230 = tpu.dynamic_rotate %204 by %c127_i32 dim 1 : vector<8x128xf32>, i32 -> vector<8x128xf32>
    %c5_90 = arith.constant 5 : index
    %c0_91 = arith.constant 0 : index
    %231 = vector.load %arg6[%c5_90, %c0_91] : memref<9x128xf32, #tpu.memory_space<vmem>>, vector<1x128xf32>
    %232 = vector.broadcast %231 : vector<1x128xf32> to vector<8x128xf32>
    %233 = arith.mulf %230, %232 : vector<8x128xf32>
    %c40_92 = arith.constant 40 : index
    %c0_93 = arith.constant 0 : index
    %234 = vector.load %arg12[%c40_92, %c0_93] : memref<72x128xf32, #tpu.memory_space<vmem>>, vector<8x128xf32>
    tpu.vector_store %arg12[%c40_92, %c0_93], %233 {strides = array<i32>} : memref<72x128xf32, #tpu.memory_space<vmem>>, vector<8x128xf32>,
    %c121_i32 = arith.constant 121 : i32
    %235 = tpu.dynamic_rotate %204 by %c121_i32 dim 1 : vector<8x128xf32>, i32 -> vector<8x128xf32>
    %c6_94 = arith.constant 6 : index
    %c0_95 = arith.constant 0 : index
    %236 = vector.load %arg6[%c6_94, %c0_95] : memref<9x128xf32, #tpu.memory_space<vmem>>, vector<1x128xf32>
    %237 = vector.broadcast %236 : vector<1x128xf32> to vector<8x128xf32>
    %238 = arith.mulf %235, %237 : vector<8x128xf32>
    %c48_96 = arith.constant 48 : index
    %c0_97 = arith.constant 0 : index
    %239 = vector.load %arg12[%c48_96, %c0_97] : memref<72x128xf32, #tpu.memory_space<vmem>>, vector<8x128xf32>
    tpu.vector_store %arg12[%c48_96, %c0_97], %238 {strides = array<i32>} : memref<72x128xf32, #tpu.memory_space<vmem>>, vector<8x128xf32>,
    %c120_i32 = arith.constant 120 : i32
    %240 = tpu.dynamic_rotate %204 by %c120_i32 dim 1 : vector<8x128xf32>, i32 -> vector<8x128xf32>
    %c7_98 = arith.constant 7 : index
    %c0_99 = arith.constant 0 : index
    %241 = vector.load %arg6[%c7_98, %c0_99] : memref<9x128xf32, #tpu.memory_space<vmem>>, vector<1x128xf32>
    %242 = vector.broadcast %241 : vector<1x128xf32> to vector<8x128xf32>
    %243 = arith.mulf %240, %242 : vector<8x128xf32>
    %c56_100 = arith.constant 56 : index
    %c0_101 = arith.constant 0 : index
    %244 = vector.load %arg12[%c56_100, %c0_101] : memref<72x128xf32, #tpu.memory_space<vmem>>, vector<8x128xf32>
    tpu.vector_store %arg12[%c56_100, %c0_101], %243 {strides = array<i32>} : memref<72x128xf32, #tpu.memory_space<vmem>>, vector<8x128xf32>,
    %c119_i32 = arith.constant 119 : i32
    %245 = tpu.dynamic_rotate %204 by %c119_i32 dim 1 : vector<8x128xf32>, i32 -> vector<8x128xf32>
    %c8_102 = arith.constant 8 : index
    %c0_103 = arith.constant 0 : index
    %246 = vector.load %arg6[%c8_102, %c0_103] : memref<9x128xf32, #tpu.memory_space<vmem>>, vector<1x128xf32>
    %247 = vector.broadcast %246 : vector<1x128xf32> to vector<8x128xf32>
    %248 = arith.mulf %245, %247 : vector<8x128xf32>
    %c64_104 = arith.constant 64 : index
    %c0_105 = arith.constant 0 : index
    %249 = vector.load %arg12[%c64_104, %c0_105] : memref<72x128xf32, #tpu.memory_space<vmem>>, vector<8x128xf32>
    tpu.vector_store %arg12[%c64_104, %c0_105], %248 {strides = array<i32>} : memref<72x128xf32, #tpu.memory_space<vmem>>, vector<8x128xf32>,
    %c0_106 = arith.constant 0 : index
    %c0_107 = arith.constant 0 : index
    %250 = vector.load %arg12[%c0_106, %c0_107] : memref<72x128xf32, #tpu.memory_space<vmem>>, vector<72x128xf32>
    %cst_108 = arith.constant dense<0.000000e+00> : vector<8x128xf32>
    %251 = tpu.matmul %205, %250, %cst_108 {dimension_numbers = #tpu.dot_dimension_numbers<[1], [0], [0], [1], [0, 0, 1, 1], [], []>} : vector<8x72xf32>, vector<72x128xf32>, vector<8x128xf32> -> vector<8x128xf32>
    %252 = vector.broadcast %6 : vector<8x1xf32> to vector<8x128xf32>
    %253 = arith.addf %251, %252 : vector<8x128xf32>
    %cst_109 = arith.constant dense<0.000000e+00> : vector<8x128xf32>
    %254 = tpu.matmul %7, %10, %cst_109 {dimension_numbers = #tpu.dot_dimension_numbers<[1], [0], [0], [1], [0, 0, 1, 1], [], []>} : vector<8x512xf32>, vector<512x128xf32>, vector<8x128xf32> -> vector<8x128xf32>
    %c0_110 = arith.constant 0 : index
    %c0_111 = arith.constant 0 : index
    %255 = vector.load %arg3[%c0_110, %c0_111] : memref<8x8xf32, #tpu.memory_space<vmem>>, vector<8x8xf32>
    %cst_112 = arith.constant dense<0.000000e+00> : vector<8x128xf32>
    %256 = tpu.matmul %255, %254, %cst_112 {dimension_numbers = #tpu.dot_dimension_numbers<[1], [0], [0], [1], [0, 0, 1, 1], [], []>} : vector<8x8xf32>, vector<8x128xf32>, vector<8x128xf32> -> vector<8x128xf32>
    %257 = arith.addf %253, %256 : vector<8x128xf32>
    %cst_113 = arith.constant 0.707106769 : f32
    %258 = vector.broadcast %cst_113 : f32 to vector<8x128xf32>
    %259 = arith.mulf %257, %258 : vector<8x128xf32>
    %c0_114 = arith.constant 0 : index
    %c0_115 = arith.constant 0 : index
    %260 = vector.load %arg10[%c0_114, %c0_115] : memref<8x128xf32, #tpu.memory_space<vmem>>, vector<8x128xf32>
    tpu.vector_store %arg10[%c0_114, %c0_115], %259 {strides = array<i32>} : memref<8x128xf32, #tpu.memory_space<vmem>>, vector<8x128xf32>,
    return
  }
}

</mosaic_0001>

<llo_original>
// kernel: resblk_forward.1
$region0: #{resblk_forward.1}
  #allocation0 [shape = 'u32[]', space=smem, size = 0x4, offset = 0x4, fixed_abs, tag = 'smem constant byte address 0x4 - core index']
  #allocation1 [shape = 'u32[72,128]{1,0:T(1,128)}', space=vmem, size = 0x9000, scoped, tag = 'internal scratch']
  #allocation2 [shape = 'f32[72,512]{1,0:T(8,128)}', space=vmem, size = 0x24000, scoped, tag = 'scratch operand']
  #allocation3 [shape = 'f32[72,128]{1,0:T(8,128)}', space=vmem, size = 0x9000, scoped, tag = 'scratch operand']
  %s0 = inlined_call_operand.vmem [shape: f32[8,512], index: 0, kind: input, shape index: {}]
  %s1 = inlined_call_operand.vmem [shape: f32[8,72], index: 1, kind: input, shape index: {}]
  %s2 = inlined_call_operand.vmem [shape: f32[8,72], index: 2, kind: input, shape index: {}]
  %s3 = inlined_call_operand.vmem [shape: f32[8,8], index: 3, kind: input, shape index: {}]
  %s4 = inlined_call_operand.vmem [shape: f32[8,6], index: 4, kind: input, shape index: {}]
  %s5 = inlined_call_operand.vmem [shape: f32[9,512], index: 5, kind: input, shape index: {}]
  %s6 = inlined_call_operand.vmem [shape: f32[9,128], index: 6, kind: input, shape index: {}]
  %s7 = inlined_call_operand.vmem [shape: f32[2,512], index: 7, kind: input, shape index: {}]
  %s8 = inlined_call_operand.vmem [shape: f32[2,128], index: 8, kind: input, shape index: {}]
  %s9 = inlined_call_operand.vmem [shape: f32[512,128], index: 9, kind: input, shape index: {}]
  %s10 = inlined_call_operand.vmem [shape: f32[8,128], index: 10, kind: output, shape index: {}]
  %s11 = sld [smem:[#allocation0]]
  $region50: #{resblk_forward.1} parent=0
    _
  %s13 = ssub.s32 1, %s11
  %s14 = scalar_select 0, %s13, %s11
  // Predicated region
  $region2: #{resblk_forward.1} parent=0 // pred_check
    _
  $region3: #{resblk_forward.1} parent=0 // pred_check_branch
    %16 = sbr.rel (0) target = $region5
  $region4: #{resblk_forward.1} parent=0 // pred_region
    _
  $region5: #{resblk_forward.1} parent=0 // pred_fallthru
    _
  // Predicated region
  $region6: #{resblk_forward.1} parent=0 // pred_check
    _
  $region7: #{resblk_forward.1} parent=0 // pred_check_branch
    %18 = sbr.rel (0) target = $region9
  $region8: #{resblk_forward.1} parent=0 // pred_region
    _
  $region9: #{resblk_forward.1} parent=0 // pred_fallthru
    _
  // Predicated region
  $region10: #{resblk_forward.1} parent=0 // pred_check
    _
  $region11: #{resblk_forward.1} parent=0 // pred_check_branch
    %20 = sbr.rel (0) target = $region13
  $region12: #{resblk_forward.1} parent=0 // pred_region
    _
  $region13: #{resblk_forward.1} parent=0 // pred_fallthru
    _
  // Predicated region
  $region14: #{resblk_forward.1} parent=0 // pred_check
    _
  $region15: #{resblk_forward.1} parent=0 // pred_check_branch
    %22 = sbr.rel (0) target = $region17
  $region16: #{resblk_forward.1} parent=0 // pred_region
    _
  $region17: #{resblk_forward.1} parent=0 // pred_fallthru
    _
  // Predicated region
  $region18: #{resblk_forward.1} parent=0 // pred_check
    _
  $region19: #{resblk_forward.1} parent=0 // pred_check_branch
    %24 = sbr.rel (0) target = $region21
  $region20: #{resblk_forward.1} parent=0 // pred_region
    _
  $region21: #{resblk_forward.1} parent=0 // pred_fallthru
    _
  // Predicated region
  $region22: #{resblk_forward.1} parent=0 // pred_check
    _
  $region23: #{resblk_forward.1} parent=0 // pred_check_branch
    %26 = sbr.rel (0) target = $region25
  $region24: #{resblk_forward.1} parent=0 // pred_region
    _
  $region25: #{resblk_forward.1} parent=0 // pred_fallthru
    _
  // Predicated region
  $region26: #{resblk_forward.1} parent=0 // pred_check
    _
  $region27: #{resblk_forward.1} parent=0 // pred_check_branch
    %28 = sbr.rel (0) target = $region29
  $region28: #{resblk_forward.1} parent=0 // pred_region
    _
  $region29: #{resblk_forward.1} parent=0 // pred_fallthru
    _
  // Predicated region
  $region30: #{resblk_forward.1} parent=0 // pred_check
    _
  $region31: #{resblk_forward.1} parent=0 // pred_check_branch
    %30 = sbr.rel (0) target = $region33
  $region32: #{resblk_forward.1} parent=0 // pred_region
    _
  $region33: #{resblk_forward.1} parent=0 // pred_fallthru
    _
  // Predicated region
  $region34: #{resblk_forward.1} parent=0 // pred_check
    _
  $region35: #{resblk_forward.1} parent=0 // pred_check_branch
    %32 = sbr.rel (0) target = $region37
  $region36: #{resblk_forward.1} parent=0 // pred_region
    _
  $region37: #{resblk_forward.1} parent=0 // pred_fallthru
    _
  // Predicated region
  $region38: #{resblk_forward.1} parent=0 // pred_check
    _
  $region39: #{resblk_forward.1} parent=0 // pred_check_branch
    %34 = sbr.rel (0) target = $region41
  $region40: #{resblk_forward.1} parent=0 // pred_region
    _
  $region41: #{resblk_forward.1} parent=0 // pred_fallthru
    _
  %v35 = vld [vmem:[%s4] sm:$0xff]
  %v36 = vld [vmem:[%s0] sm:$0xff]
  %v37 = vld [vmem:[%s0 + $0x8] sm:$0xff]
  %v38 = vld [vmem:[%s0 + $0x10] sm:$0xff]
  %v39 = vld [vmem:[%s0 + $0x18] sm:$0xff]
  %v40 = vld [vmem:[%s7] sm:$0xff]
  %v41 = vld [vmem:[%s8] sm:$0x3]
  %v42 = vld [vmem:[%s9] sm:$0xff]
  %v43 = vld [vmem:[%s9 + $0x8] sm:$0xff]
  %v44 = vld [vmem:[%s9 + $0x10] sm:$0xff]
  %v45 = vld [vmem:[%s9 + $0x18] sm:$0xff]
  %v46 = vld [vmem:[%s9 + $0x20] sm:$0xff]
  %v47 = vld [vmem:[%s9 + $0x28] sm:$0xff]
  %v48 = vld [vmem:[%s9 + $0x30] sm:$0xff]
  %v49 = vld [vmem:[%s9 + $0x38] sm:$0xff]
  %v50 = vld [vmem:[%s9 + $0x40] sm:$0xff]
  %v51 = vld [vmem:[%s9 + $0x48] sm:$0xff]
  %v52 = vld [vmem:[%s9 + $0x50] sm:$0xff]
  %v53 = vld [vmem:[%s9 + $0x58] sm:$0xff]
  %v54 = vld [vmem:[%s9 + $0x60] sm:$0xff]
  %v55 = vld [vmem:[%s9 + $0x68] sm:$0xff]
  %v56 = vld [vmem:[%s9 + $0x70] sm:$0xff]
  %v57 = vld [vmem:[%s9 + $0x78] sm:$0xff]
  %v58 = vld [vmem:[%s9 + $0x80] sm:$0xff]
  %v59 = vld [vmem:[%s9 + $0x88] sm:$0xff]
  %v60 = vld [vmem:[%s9 + $0x90] sm:$0xff]
  %v61 = vld [vmem:[%s9 + $0x98] sm:$0xff]
  %v62 = vld [vmem:[%s9 + $0xa0] sm:$0xff]
  %v63 = vld [vmem:[%s9 + $0xa8] sm:$0xff]
  %v64 = vld [vmem:[%s9 + $0xb0] sm:$0xff]
  %v65 = vld [vmem:[%s9 + $0xb8] sm:$0xff]
  %v66 = vld [vmem:[%s9 + $0xc0] sm:$0xff]
  %v67 = vld [vmem:[%s9 + $0xc8] sm:$0xff]
  %v68 = vld [vmem:[%s9 + $0xd0] sm:$0xff]
  %v69 = vld [vmem:[%s9 + $0xd8] sm:$0xff]
  %v70 = vld [vmem:[%s9 + $0xe0] sm:$0xff]
  %v71 = vld [vmem:[%s9 + $0xe8] sm:$0xff]
  %v72 = vld [vmem:[%s9 + $0xf0] sm:$0xff]
  %v73 = vld [vmem:[%s9 + $0xf8] sm:$0xff]
  %v74 = vld [vmem:[%s9 + $0x100] sm:$0xff]
  %v75 = vld [vmem:[%s9 + $0x108] sm:$0xff]
  %v76 = vld [vmem:[%s9 + $0x110] sm:$0xff]
  %v77 = vld [vmem:[%s9 + $0x118] sm:$0xff]
  %v78 = vld [vmem:[%s9 + $0x120] sm:$0xff]
  %v79 = vld [vmem:[%s9 + $0x128] sm:$0xff]
  %v80 = vld [vmem:[%s9 + $0x130] sm:$0xff]
  %v81 = vld [vmem:[%s9 + $0x138] sm:$0xff]
  %v82 = vld [vmem:[%s9 + $0x140] sm:$0xff]
  %v83 = vld [vmem:[%s9 + $0x148] sm:$0xff]
  %v84 = vld [vmem:[%s9 + $0x150] sm:$0xff]
  %v85 = vld [vmem:[%s9 + $0x158] sm:$0xff]
  %v86 = vld [vmem:[%s9 + $0x160] sm:$0xff]
  %v87 = vld [vmem:[%s9 + $0x168] sm:$0xff]
  %v88 = vld [vmem:[%s9 + $0x170] sm:$0xff]
  %v89 = vld [vmem:[%s9 + $0x178] sm:$0xff]
  %v90 = vld [vmem:[%s9 + $0x180] sm:$0xff]
  %v91 = vld [vmem:[%s9 + $0x188] sm:$0xff]
  %v92 = vld [vmem:[%s9 + $0x190] sm:$0xff]
  %v93 = vld [vmem:[%s9 + $0x198] sm:$0xff]
  %v94 = vld [vmem:[%s9 + $0x1a0] sm:$0xff]
  %v95 = vld [vmem:[%s9 + $0x1a8] sm:$0xff]
  %v96 = vld [vmem:[%s9 + $0x1b0] sm:$0xff]
  %v97 = vld [vmem:[%s9 + $0x1b8] sm:$0xff]
  %v98 = vld [vmem:[%s9 + $0x1c0] sm:$0xff]
  %v99 = vld [vmem:[%s9 + $0x1c8] sm:$0xff]
  %v100 = vld [vmem:[%s9 + $0x1d0] sm:$0xff]
  %v101 = vld [vmem:[%s9 + $0x1d8] sm:$0xff]
  %v102 = vld [vmem:[%s9 + $0x1e0] sm:$0xff]
  %v103 = vld [vmem:[%s9 + $0x1e8] sm:$0xff]
  %v104 = vld [vmem:[%s9 + $0x1f0] sm:$0xff]
  %v105 = vld [vmem:[%s9 + $0x1f8] sm:$0xff]
  %v106 = vmul.f32 %v36, %v36
  %v107 = vmul.f32 %v37, %v37
  %v108 = vmul.f32 %v38, %v38
  %v109 = vmul.f32 %v39, %v39
  %v111 = vperm.slane %v40, 0
  %v112 = vperm.slane %v40, 2
  %v113 = vperm.slane %v40, 4
  %v114 = vperm.slane %v40, 6
  %v119 = vperm.slane %v111, 0
  %v120 = vperm.slane %v112, 0
  %v121 = vperm.slane %v113, 0
  %v122 = vperm.slane %v114, 0
  %v123 = vmul.f32 %v36, %v119
  %v124 = vmul.f32 %v37, %v120
  %v125 = vmul.f32 %v38, %v121
  %v126 = vmul.f32 %v39, %v122
  %v127 = vadd.f32 %v123, %v124
  %v128 = vadd.f32 %v127, %v125
  %v129 = vadd.f32 %v128, %v126
  %130 = vadd.xlane.f32.xlu0 %v129
  %v131 = vpop.xlane.xlu0 %130
  %v132 = vmul.f32 %v131, 0.00390625
  %v133 = vmul.f32 %v106, %v119
  %v134 = vmul.f32 %v107, %v120
  %v135 = vmul.f32 %v108, %v121
  %v136 = vmul.f32 %v109, %v122
  %v137 = vadd.f32 %v133, %v134
  %v138 = vadd.f32 %v137, %v135
  %v139 = vadd.f32 %v138, %v136
  %140 = vadd.xlane.f32.xlu0 %v139
  %v141 = vpop.xlane.xlu0 %140
  %v142 = vmul.f32 %v141, 0.00390625
  %v143 = vmul.f32 %v132, %v132
  %v144 = vsub.f32 %v142, %v143
  %v145 = vmax.f32 %v144, 0.0
  %v146 = vadd.f32 %v145, 1e-05
  %v147 = vrsqrt.pop %v146
  %v148 = vmul.f32 %v147, %v146
  %v149 = vmul.f32 %v148, %v147
  %v150 = vmul.f32 0.5, %v149
  %v151 = vsub.f32 1.5, %v150
  %v152 = vmul.f32 %v147, %v151
  %vm153 = vweird.f32 %v146
  %vm154 = vweird.f32 %v147
  %vm155 = vmor %vm153, %vm154
  %v156 = vsel %vm155, %v147, %v152
  %v157 = vmul.f32 %v35, %v156
  %v158 = vmul.f32 %v132, %v157
  %160 = vrot.lane.b32.xlu0 %v158, 1
  %v161 = vpop.permute.xlu0 %160
  %v163 = vsub.f32 %v35, %v161
  %165 = vset.pattern.permute.xlu0 1
  %166 = vperm.xlu0 %165, %v157
  %v167 = vpop.permute.xlu0 %166
  %v169 = vmul.f32 %v167, %v119
  %v170 = vmul.f32 %v167, %v120
  %v171 = vmul.f32 %v167, %v121
  %v172 = vmul.f32 %v167, %v122
  %v173 = vadd.f32 %v169, 0.0
  %v174 = vadd.f32 %v170, 0.0
  %v175 = vadd.f32 %v171, 0.0
  %v176 = vadd.f32 %v172, 0.0
  %178 = vset.pattern.permute.xlu0 2
  %179 = vperm.xlu0 %178, %v163
  %v180 = vpop.permute.xlu0 %179
  %v182 = vmul.f32 %v180, %v119
  %v183 = vmul.f32 %v180, %v120
  %v184 = vmul.f32 %v180, %v121
  %v185 = vmul.f32 %v180, %v122
  %v186 = vadd.f32 %v182, 0.0
  %v187 = vadd.f32 %v183, 0.0
  %v188 = vadd.f32 %v184, 0.0
  %v189 = vadd.f32 %v185, 0.0
  %v190 = vperm.slane %v40, 1
  %v191 = vperm.slane %v40, 3
  %v192 = vperm.slane %v40, 5
  %v193 = vperm.slane %v40, 7
  %v198 = vperm.slane %v190, 1
  %v199 = vperm.slane %v191, 1
  %v200 = vperm.slane %v192, 1
  %v201 = vperm.slane %v193, 1
  %v202 = vmul.f32 %v36, %v198
  %v203 = vmul.f32 %v37, %v199
  %v204 = vmul.f32 %v38, %v200
  %v205 = vmul.f32 %v39, %v201
  %v206 = vadd.f32 %v202, %v203
  %v207 = vadd.f32 %v206, %v204
  %v208 = vadd.f32 %v207, %v205
  %209 = vadd.xlane.f32.xlu0 %v208
  %v210 = vpop.xlane.xlu0 %209
  %v211 = vmul.f32 %v210, 0.00390625
  %v212 = vmul.f32 %v106, %v198
  %v213 = vmul.f32 %v107, %v199
  %v214 = vmul.f32 %v108, %v200
  %v215 = vmul.f32 %v109, %v201
  %v216 = vadd.f32 %v212, %v213
  %v217 = vadd.f32 %v216, %v214
  %v218 = vadd.f32 %v217, %v215
  %219 = vadd.xlane.f32.xlu0 %v218
  %v220 = vpop.xlane.xlu0 %219
  %v221 = vmul.f32 %v220, 0.00390625
  %v222 = vmul.f32 %v211, %v211
  %v223 = vsub.f32 %v221, %v222
  %v224 = vmax.f32 %v223, 0.0
  %v225 = vadd.f32 %v224, 1e-05
  %v226 = vrsqrt.pop %v225
  %v227 = vmul.f32 %v226, %v225
  %v228 = vmul.f32 %v227, %v226
  %v229 = vmul.f32 0.5, %v228
  %v230 = vsub.f32 1.5, %v229
  %v231 = vmul.f32 %v226, %v230
  %vm232 = vweird.f32 %v225
  %vm233 = vweird.f32 %v226
  %vm234 = vmor %vm232, %vm233
  %v235 = vsel %vm234, %v226, %v231
  %v236 = vmul.f32 %v35, %v235
  %v237 = vmul.f32 %v211, %v236
  %239 = vrot.lane.b32.xlu0 %v237, 1
  %v240 = vpop.permute.xlu0 %239
  %v242 = vsub.f32 %v35, %v240
  %244 = vset.pattern.permute.xlu0 1
  %245 = vperm.xlu0 %244, %v236
  %v246 = vpop.permute.xlu0 %245
  %v248 = vmul.f32 %v246, %v198
  %v249 = vmul.f32 %v246, %v199
  %v250 = vmul.f32 %v246, %v200
  %v251 = vmul.f32 %v246, %v201
  %v252 = vadd.f32 %v173, %v248
  %v253 = vadd.f32 %v174, %v249
  %v254 = vadd.f32 %v175, %v250
  %v255 = vadd.f32 %v176, %v251
  %257 = vset.pattern.permute.xlu0 2
  %258 = vperm.xlu0 %257, %v242
  %v259 = vpop.permute.xlu0 %258
  %v261 = vmul.f32 %v259, %v198
  %v262 = vmul.f32 %v259, %v199
  %v263 = vmul.f32 %v259, %v200
  %v264 = vmul.f32 %v259, %v201
  %v265 = vadd.f32 %v186, %v261
  %v266 = vadd.f32 %v187, %v262
  %v267 = vadd.f32 %v188, %v263
  %v268 = vadd.f32 %v189, %v264
  %v269 = vmul.f32 %v36, %v252
  %v270 = vmul.f32 %v37, %v253
  %v271 = vmul.f32 %v38, %v254
  %v272 = vmul.f32 %v39, %v255
  %v273 = vadd.f32 %v269, %v265
  %v274 = vadd.f32 %v270, %v266
  %v275 = vadd.f32 %v271, %v267
  %v276 = vadd.f32 %v272, %v268
  %vm277 = vcmp.ge.f32.partialorder %v273, 0.0
  %vm278 = vcmp.ge.f32.partialorder %v274, 0.0
  %vm279 = vcmp.ge.f32.partialorder %v275, 0.0
  %vm280 = vcmp.ge.f32.partialorder %v276, 0.0
  %v281 = vmul.f32 %v273, 0.2
  %v282 = vmul.f32 %v274, 0.2
  %v283 = vmul.f32 %v275, 0.2
  %v284 = vmul.f32 %v276, 0.2
  %v285 = vsel %vm277, %v273, %v281
  %v286 = vsel %vm278, %v274, %v282
  %v287 = vsel %vm279, %v275, %v283
  %v288 = vsel %vm280, %v276, %v284
  %v289 = vld [vmem:[%s1] sm:$0xff]
  %290 = vrot.lane.b32.xlu0 %v285, 17
  %v291 = vpop.permute.xlu0 %290
  %292 = vrot.lane.b32.xlu0 %v286, 17
  %v293 = vpop.permute.xlu0 %292
  %294 = vrot.lane.b32.xlu0 %v287, 17
  %v295 = vpop.permute.xlu0 %294
  %296 = vrot.lane.b32.xlu0 %v288, 17
  %v297 = vpop.permute.xlu0 %296
  %v298 = vlaneseq
  %v299 = vand.u32 %v298, 127
  %vm300 = vcmp.lt.s32.totalorder %v299, 17
  %v301 = vsel %vm300, %v295, %v297
  %v302 = vsel %vm300, %v293, %v295
  %v303 = vsel %vm300, %v291, %v293
  %v304 = vsel %vm300, %v297, %v291
  %v305 = vld [vmem:[%s5] ss:$8 sm:$0xf]
  %v307 = vperm.slane %v305, 0
  %v308 = vperm.slane %v305, 1
  %v309 = vperm.slane %v305, 2
  %v310 = vperm.slane %v305, 3
  %v315 = vmul.f32 %v304, %v307
  %v316 = vmul.f32 %v303, %v308
  %v317 = vmul.f32 %v302, %v309
  %v318 = vmul.f32 %v301, %v310
  %319 = vst [vmem:[#allocation2] sm:$0xff] %v315
  %320 = vst [vmem:[#allocation2 + $0x8] sm:$0xff] %v316
  %321 = vst [vmem:[#allocation2 + $0x10] sm:$0xff] %v317
  %322 = vst [vmem:[#allocation2 + $0x18] sm:$0xff] %v318
  %323 = vrot.lane.b32.xlu0 %v285, 16
  %v324 = vpop.permute.xlu0 %323
  %325 = vrot.lane.b32.xlu0 %v286, 16
  %v326 = vpop.permute.xlu0 %325
  %327 = vrot.lane.b32.xlu0 %v287, 16
  %v328 = vpop.permute.xlu0 %327
  %329 = vrot.lane.b32.xlu0 %v288, 16
  %v330 = vpop.permute.xlu0 %329
  %vm331 = vcmp.lt.s32.totalorder %v299, 16
  %v332 = vsel %vm331, %v328, %v330
  %v333 = vsel %vm331, %v326, %v328
  %v334 = vsel %vm331, %v324, %v326
  %v335 = vsel %vm331, %v330, %v324
  %s336 = scalar_lea.vmem %s5, 1
  %v337 = vld [vmem:[%s336] ss:$8 sm:$0xf]
  %v339 = vperm.slane %v337, 0
  %v340 = vperm.slane %v337, 1
  %v341 = vperm.slane %v337, 2
  %v342 = vperm.slane %v337, 3
  %v347 = vmul.f32 %v335, %v339
  %v348 = vmul.f32 %v334, %v340
  %v349 = vmul.f32 %v333, %v341
  %v350 = vmul.f32 %v332, %v342
  %351 = vst [vmem:[#allocation2 + $0x20] sm:$0xff] %v347
  %352 = vst [vmem:[#allocation2 + $0x28] sm:$0xff] %v348
  %353 = vst [vmem:[#allocation2 + $0x30] sm:$0xff] %v349
  %354 = vst [vmem:[#allocation2 + $0x38] sm:$0xff] %v350
  %355 = vrot.lane.b32.xlu0 %v285, 15
  %v356 = vpop.permute.xlu0 %355
  %357 = vrot.lane.b32.xlu0 %v286, 15
  %v358 = vpop.permute.xlu0 %357
  %359 = vrot.lane.b32.xlu0 %v287, 15
  %v360 = vpop.permute.xlu0 %359
  %361 = vrot.lane.b32.xlu0 %v288, 15
  %v362 = vpop.permute.xlu0 %361
  %vm363 = vcmp.lt.s32.totalorder %v299, 15
  %v364 = vsel %vm363, %v360, %v362
  %v365 = vsel %vm363, %v358, %v360
  %v366 = vsel %vm363, %v356, %v358
  %v367 = vsel %vm363, %v362, %v356
  %s368 = scalar_lea.vmem %s5, 2
  %v369 = vld [vmem:[%s368] ss:$8 sm:$0xf]
  %v371 = vperm.slane %v369, 0
  %v372 = vperm.slane %v369, 1
  %v373 = vperm.slane %v369, 2
  %v374 = vperm.slane %v369, 3
  %v379 = vmul.f32 %v367, %v371
  %v380 = vmul.f32 %v366, %v372
  %v381 = vmul.f32 %v365, %v373
  %v382 = vmul.f32 %v364, %v374
  %383 = vst [vmem:[#allocation2 + $0x40] sm:$0xff] %v379
  %384 = vst [vmem:[#allocation2 + $0x48] sm:$0xff] %v380
  %385 = vst [vmem:[#allocation2 + $0x50] sm:$0xff] %v381
  %386 = vst [vmem:[#allocation2 + $0x58] sm:$0xff] %v382
  %387 = vrot.lane.b32.xlu0 %v285, 1
  %v388 = vpop.permute.xlu0 %387
  %389 = vrot.lane.b32.xlu0 %v286, 1
  %v390 = vpop.permute.xlu0 %389
  %391 = vrot.lane.b32.xlu0 %v287, 1
  %v392 = vpop.permute.xlu0 %391
  %393 = vrot.lane.b32.xlu0 %v288, 1
  %v394 = vpop.permute.xlu0 %393
  %vm395 = vcmp.lt.s32.totalorder %v299, 1
  %v396 = vsel %vm395, %v392, %v394
  %v397 = vsel %vm395, %v390, %v392
  %v398 = vsel %vm395, %v388, %v390
  %v399 = vsel %vm395, %v394, %v388
  %s400 = scalar_lea.vmem %s5, 3
  %v401 = vld [vmem:[%s400] ss:$8 sm:$0xf]
  %v403 = vperm.slane %v401, 0
  %v404 = vperm.slane %v401, 1
  %v405 = vperm.slane %v401, 2
  %v406 = vperm.slane %v401, 3
  %v411 = vmul.f32 %v399, %v403
  %v412 = vmul.f32 %v398, %v404
  %v413 = vmul.f32 %v397, %v405
  %v414 = vmul.f32 %v396, %v406
  %415 = vst [vmem:[#allocation2 + $0x60] sm:$0xff] %v411
  %416 = vst [vmem:[#allocation2 + $0x68] sm:$0xff] %v412
  %417 = vst [vmem:[#allocation2 + $0x70] sm:$0xff] %v413
  %418 = vst [vmem:[#allocation2 + $0x78] sm:$0xff] %v414
  %s419 = scalar_lea.vmem %s5, 4
  %v420 = vld [vmem:[%s419] ss:$8 sm:$0xf]
  %v422 = vperm.slane %v420, 0
  %v423 = vperm.slane %v420, 1
  %v424 = vperm.slane %v420, 2
  %v425 = vperm.slane %v420, 3
  %v430 = vmul.f32 %v285, %v422
  %v431 = vmul.f32 %v286, %v423
  %v432 = vmul.f32 %v287, %v424
  %v433 = vmul.f32 %v288, %v425
  %434 = vst [vmem:[#allocation2 + $0x80] sm:$0xff] %v430
  %435 = vst [vmem:[#allocation2 + $0x88] sm:$0xff] %v431
  %436 = vst [vmem:[#allocation2 + $0x90] sm:$0xff] %v432
  %437 = vst [vmem:[#allocation2 + $0x98] sm:$0xff] %v433
  %438 = vrot.lane.b32.xlu0 %v285, 127
  %v439 = vpop.permute.xlu0 %438
  %440 = vrot.lane.b32.xlu0 %v286, 127
  %v441 = vpop.permute.xlu0 %440
  %442 = vrot.lane.b32.xlu0 %v287, 127
  %v443 = vpop.permute.xlu0 %442
  %444 = vrot.lane.b32.xlu0 %v288, 127
  %v445 = vpop.permute.xlu0 %444
  %vm446 = vcmp.lt.s32.totalorder %v299, 127
  %v447 = vsel %vm446, %v443, %v445
  %v448 = vsel %vm446, %v441, %v443
  %v449 = vsel %vm446, %v439, %v441
  %v450 = vsel %vm446, %v445, %v439
  %s451 = scalar_lea.vmem %s5, 5
  %v452 = vld [vmem:[%s451] ss:$8 sm:$0xf]
  %v454 = vperm.slane %v452, 0
  %v455 = vperm.slane %v452, 1
  %v456 = vperm.slane %v452, 2
  %v457 = vperm.slane %v452, 3
  %v462 = vmul.f32 %v449, %v454
  %v463 = vmul.f32 %v448, %v455
  %v464 = vmul.f32 %v447, %v456
  %v465 = vmul.f32 %v450, %v457
  %466 = vst [vmem:[#allocation2 + $0xa0] sm:$0xff] %v462
  %467 = vst [vmem:[#allocation2 + $0xa8] sm:$0xff] %v463
  %468 = vst [vmem:[#allocation2 + $0xb0] sm:$0xff] %v464
  %469 = vst [vmem:[#allocation2 + $0xb8] sm:$0xff] %v465
  %470 = vrot.lane.b32.xlu0 %v285, 113
  %v471 = vpop.permute.xlu0 %470
  %472 = vrot.lane.b32.xlu0 %v286, 113
  %v473 = vpop.permute.xlu0 %472
  %474 = vrot.lane.b32.xlu0 %v287, 113
  %v475 = vpop.permute.xlu0 %474
  %476 = vrot.lane.b32.xlu0 %v288, 113
  %v477 = vpop.permute.xlu0 %476
  %vm478 = vcmp.lt.s32.totalorder %v299, 113
  %v479 = vsel %vm478, %v475, %v477
  %v480 = vsel %vm478, %v473, %v475
  %v481 = vsel %vm478, %v471, %v473
  %v482 = vsel %vm478, %v477, %v471
  %s483 = scalar_lea.vmem %s5, 6
  %v484 = vld [vmem:[%s483] ss:$8 sm:$0xf]
  %v486 = vperm.slane %v484, 0
  %v487 = vperm.slane %v484, 1
  %v488 = vperm.slane %v484, 2
  %v489 = vperm.slane %v484, 3
  %v494 = vmul.f32 %v481, %v486
  %v495 = vmul.f32 %v480, %v487
  %v496 = vmul.f32 %v479, %v488
  %v497 = vmul.f32 %v482, %v489
  %498 = vst [vmem:[#allocation2 + $0xc0] sm:$0xff] %v494
  %499 = vst [vmem:[#allocation2 + $0xc8] sm:$0xff] %v495
  %500 = vst [vmem:[#allocation2 + $0xd0] sm:$0xff] %v496
  %501 = vst [vmem:[#allocation2 + $0xd8] sm:$0xff] %v497
  %502 = vrot.lane.b32.xlu0 %v285, 112
  %v503 = vpop.permute.xlu0 %502
  %504 = vrot.lane.b32.xlu0 %v286, 112
  %v505 = vpop.permute.xlu0 %504
  %506 = vrot.lane.b32.xlu0 %v287, 112
  %v507 = vpop.permute.xlu0 %506
  %508 = vrot.lane.b32.xlu0 %v288, 112
  %v509 = vpop.permute.xlu0 %508
  %vm510 = vcmp.lt.s32.totalorder %v299, 112
  %v511 = vsel %vm510, %v507, %v509
  %v512 = vsel %vm510, %v505, %v507
  %v513 = vsel %vm510, %v503, %v505
  %v514 = vsel %vm510, %v509, %v503
  %s515 = scalar_lea.vmem %s5, 7
  %v516 = vld [vmem:[%s515] ss:$8 sm:$0xf]
  %v518 = vperm.slane %v516, 0
  %v519 = vperm.slane %v516, 1
  %v520 = vperm.slane %v516, 2
  %v521 = vperm.slane %v516, 3
  %v526 = vmul.f32 %v513, %v518
  %v527 = vmul.f32 %v512, %v519
  %v528 = vmul.f32 %v511, %v520
  %v529 = vmul.f32 %v514, %v521
  %530 = vst [vmem:[#allocation2 + $0xe0] sm:$0xff] %v526
  %531 = vst [vmem:[#allocation2 + $0xe8] sm:$0xff] %v527
  %532 = vst [vmem:[#allocation2 + $0xf0] sm:$0xff] %v528
  %533 = vst [vmem:[#allocation2 + $0xf8] sm:$0xff] %v529
  %534 = vrot.lane.b32.xlu0 %v285, 111
  %v535 = vpop.permute.xlu0 %534
  %536 = vrot.lane.b32.xlu0 %v286, 111
  %v537 = vpop.permute.xlu0 %536
  %538 = vrot.lane.b32.xlu0 %v287, 111
  %v539 = vpop.permute.xlu0 %538
  %540 = vrot.lane.b32.xlu0 %v288, 111
  %v541 = vpop.permute.xlu0 %540
  %vm542 = vcmp.lt.s32.totalorder %v299, 111
  %v543 = vsel %vm542, %v539, %v541
  %v544 = vsel %vm542, %v537, %v539
  %v545 = vsel %vm542, %v535, %v537
  %v546 = vsel %vm542, %v541, %v535
  %s547 = scalar_lea.vmem %s5, 32
  %v548 = vld [vmem:[%s547] ss:$8 sm:$0xf]
  %v550 = vperm.slane %v548, 0
  %v551 = vperm.slane %v548, 1
  %v552 = vperm.slane %v548, 2
  %v553 = vperm.slane %v548, 3
  %v558 = vmul.f32 %v545, %v550
  %v559 = vmul.f32 %v544, %v551
  %v560 = vmul.f32 %v543, %v552
  %v561 = vmul.f32 %v546, %v553
  %562 = vst [vmem:[#allocation2 + $0x100] sm:$0xff] %v558
  %563 = vst [vmem:[#allocation2 + $0x108] sm:$0xff] %v559
  %564 = vst [vmem:[#allocation2 + $0x110] sm:$0xff] %v560
  %565 = vst [vmem:[#allocation2 + $0x118] sm:$0xff] %v561
  %v566 = vld [vmem:[#allocation2] sm:$0xff]
  %v567 = vld [vmem:[#allocation2 + $0x8] sm:$0xff]
  %v568 = vld [vmem:[#allocation2 + $0x10] sm:$0xff]
  %v569 = vld [vmem:[#allocation2 + $0x18] sm:$0xff]
  %v570 = vld [vmem:[#allocation2 + $0x20] sm:$0xff]
  %v571 = vld [vmem:[#allocation2 + $0x28] sm:$0xff]
  %v572 = vld [vmem:[#allocation2 + $0x30] sm:$0xff]
  %v573 = vld [vmem:[#allocation2 + $0x38] sm:$0xff]
  %v574 = vld [vmem:[#allocation2 + $0x40] sm:$0xff]
  %v575 = vld [vmem:[#allocation2 + $0x48] sm:$0xff]
  %v576 = vld [vmem:[#allocation2 + $0x50] sm:$0xff]
  %v577 = vld [vmem:[#allocation2 + $0x58] sm:$0xff]
  %v578 = vld [vmem:[#allocation2 + $0x60] sm:$0xff]
  %v579 = vld [vmem:[#allocation2 + $0x68] sm:$0xff]
  %v580 = vld [vmem:[#allocation2 + $0x70] sm:$0xff]
  %v581 = vld [vmem:[#allocation2 + $0x78] sm:$0xff]
  %v582 = vld [vmem:[#allocation2 + $0x80] sm:$0xff]
  %v583 = vld [vmem:[#allocation2 + $0x88] sm:$0xff]
  %v584 = vld [vmem:[#allocation2 + $0x90] sm:$0xff]
  %v585 = vld [vmem:[#allocation2 + $0x98] sm:$0xff]
  %v586 = vld [vmem:[#allocation2 + $0xa0] sm:$0xff]
  %v587 = vld [vmem:[#allocation2 + $0xa8] sm:$0xff]
  %v588 = vld [vmem:[#allocation2 + $0xb0] sm:$0xff]
  %v589 = vld [vmem:[#allocation2 + $0xb8] sm:$0xff]
  %v590 = vld [vmem:[#allocation2 + $0xc0] sm:$0xff]
  %v591 = vld [vmem:[#allocation2 + $0xc8] sm:$0xff]
  %v592 = vld [vmem:[#allocation2 + $0xd0] sm:$0xff]
  %v593 = vld [vmem:[#allocation2 + $0xd8] sm:$0xff]
  %v594 = vld [vmem:[#allocation2 + $0xe0] sm:$0xff]
  %v595 = vld [vmem:[#allocation2 + $0xe8] sm:$0xff]
  %v596 = vld [vmem:[#allocation2 + $0xf0] sm:$0xff]
  %v597 = vld [vmem:[#allocation2 + $0xf8] sm:$0xff]
  %v598 = vld [vmem:[#allocation2 + $0x100] sm:$0xff]
  %v599 = vld [vmem:[#allocation2 + $0x108] sm:$0xff]
  %v600 = vld [vmem:[#allocation2 + $0x110] sm:$0xff]
  %v601 = vld [vmem:[#allocation2 + $0x118] sm:$0xff]
  %603 = vset.pattern.permute.xlu0 0
  %604 = vperm.xlu0 %603, %v35
  %v605 = vpop.permute.xlu0 %604
  %vm607 = vcmask 588800
  %v609 = vsel %vm607, %v289, 0
  %611 = vmatpush.msra.mxu0 0.0
  %612 = vmatpush.msra.mxu0 0.0
  %613 = vmatpush.msra.mxu0 0.0
  %614 = vmatpush.msra.mxu0 0.0
  %615 = vmatpush.msra.mxu0 0.0
  %616 = vmatpush.msra.mxu0 0.0
  %617 = vmatpush.msra.mxu0 0.0
  %618 = vmatpush.msra.mxu0 %v598
  %619 = vmatpush.msra.mxu0 %v594
  %620 = vmatpush.msra.mxu0 %v590
  %621 = vmatpush.msra.mxu0 %v586
  %622 = vmatpush.msra.mxu0 %v582
  %623 = vmatpush.msra.mxu0 %v578
  %624 = vmatpush.msra.mxu0 %v574
  %625 = vmatpush.msra.mxu0 %v570
  %626 = vmatpush.msra.mxu0 %v566
  %627 = vmatmul.f32.gmra.mxu0 %v609
  %v628 = vpop.f32.mrf.mxu0
  %v629 = vadd.f32 %v605, %v628
  %630 = vdwg.mxu0
  %631 = vmatpush.msra.mxu0 0.0
  %632 = vmatpush.msra.mxu0 0.0
  %633 = vmatpush.msra.mxu0 0.0
  %634 = vmatpush.msra.mxu0 0.0
  %635 = vmatpush.msra.mxu0 0.0
  %636 = vmatpush.msra.mxu0 0.0
  %637 = vmatpush.msra.mxu0 0.0
  %638 = vmatpush.msra.mxu0 %v599
  %639 = vmatpush.msra.mxu0 %v595
  %640 = vmatpush.msra.mxu0 %v591
  %641 = vmatpush.msra.mxu0 %v587
  %642 = vmatpush.msra.mxu0 %v583
  %643 = vmatpush.msra.mxu0 %v579
  %644 = vmatpush.msra.mxu0 %v575
  %645 = vmatpush.msra.mxu0 %v571
  %646 = vmatpush.msra.mxu0 %v567
  %647 = vmatmul.f32.gmra.mxu0 %v609
  %v648 = vpop.f32.mrf.mxu0
  %v649 = vadd.f32 %v605, %v648
  %650 = vdwg.mxu0
  %651 = vmatpush.msra.mxu0 0.0
  %652 = vmatpush.msra.mxu0 0.0
  %653 = vmatpush.msra.mxu0 0.0
  %654 = vmatpush.msra.mxu0 0.0
  %655 = vmatpush.msra.mxu0 0.0
  %656 = vmatpush.msra.mxu0 0.0
  %657 = vmatpush.msra.mxu0 0.0
  %658 = vmatpush.msra.mxu0 %v600
  %659 = vmatpush.msra.mxu0 %v596
  %660 = vmatpush.msra.mxu0 %v592
  %661 = vmatpush.msra.mxu0 %v588
  %662 = vmatpush.msra.mxu0 %v584
  %663 = vmatpush.msra.mxu0 %v580
  %664 = vmatpush.msra.mxu0 %v576
  %665 = vmatpush.msra.mxu0 %v572
  %666 = vmatpush.msra.mxu0 %v568
  %667 = vmatmul.f32.gmra.mxu0 %v609
  %v668 = vpop.f32.mrf.mxu0
  %v669 = vadd.f32 %v605, %v668
  %670 = vdwg.mxu0
  %671 = vmatpush.msra.mxu0 0.0
  %672 = vmatpush.msra.mxu0 0.0
  %673 = vmatpush.msra.mxu0 0.0
  %674 = vmatpush.msra.mxu0 0.0
  %675 = vmatpush.msra.mxu0 0.0
  %676 = vmatpush.msra.mxu0 0.0
  %677 = vmatpush.msra.mxu0 0.0
  %678 = vmatpush.msra.mxu0 %v601
  %679 = vmatpush.msra.mxu0 %v597
  %680 = vmatpush.msra.mxu0 %v593
  %681 = vmatpush.msra.mxu0 %v589
  %682 = vmatpush.msra.mxu0 %v585
  %683 = vmatpush.msra.mxu0 %v581
  %684 = vmatpush.msra.mxu0 %v577
  %685 = vmatpush.msra.mxu0 %v573
  %686 = vmatpush.msra.mxu0 %v569
  %687 = vmatmul.f32.gmra.mxu0 %v609
  %v688 = vpop.f32.mrf.mxu0
  %v689 = vadd.f32 %v605, %v688
  %690 = vdwg.mxu0
  %691 = vmatpush.msra.mxu0 %v57
  %692 = vmatpush.msra.mxu0 %v56
  %693 = vmatpush.msra.mxu0 %v55
  %694 = vmatpush.msra.mxu0 %v54
  %695 = vmatpush.msra.mxu0 %v53
  %696 = vmatpush.msra.mxu0 %v52
  %697 = vmatpush.msra.mxu0 %v51
  %698 = vmatpush.msra.mxu0 %v50
  %699 = vmatpush.msra.mxu0 %v49
  %700 = vmatpush.msra.mxu0 %v48
  %701 = vmatpush.msra.mxu0 %v47
  %702 = vmatpush.msra.mxu0 %v46
  %703 = vmatpush.msra.mxu0 %v45
  %704 = vmatpush.msra.mxu0 %v44
  %705 = vmatpush.msra.mxu0 %v43
  %706 = vmatpush.msra.mxu0 %v42
  %707 = vmatmul.f32.gmra.mxu0 %v629
  %v708 = vpop.f32.mrf.mxu0
  %v709 = vadd.f32 0.0, %v708
  %710 = vdwg.mxu0
  %711 = vmatpush.msra.mxu0 %v73
  %712 = vmatpush.msra.mxu0 %v72
  %713 = vmatpush.msra.mxu0 %v71
  %714 = vmatpush.msra.mxu0 %v70
  %715 = vmatpush.msra.mxu0 %v69
  %716 = vmatpush.msra.mxu0 %v68
  %717 = vmatpush.msra.mxu0 %v67
  %718 = vmatpush.msra.mxu0 %v66
  %719 = vmatpush.msra.mxu0 %v65
  %720 = vmatpush.msra.mxu0 %v64
  %721 = vmatpush.msra.mxu0 %v63
  %722 = vmatpush.msra.mxu0 %v62
  %723 = vmatpush.msra.mxu0 %v61
  %724 = vmatpush.msra.mxu0 %v60
  %725 = vmatpush.msra.mxu0 %v59
  %726 = vmatpush.msra.mxu0 %v58
  %727 = vmatmul.f32.gmra.mxu0 %v649
  %v728 = vpop.f32.mrf.mxu0
  %v729 = vadd.f32 %v709, %v728
  %730 = vdwg.mxu0
  %731 = vmatpush.msra.mxu0 %v89
  %732 = vmatpush.msra.mxu0 %v88
  %733 = vmatpush.msra.mxu0 %v87
  %734 = vmatpush.msra.mxu0 %v86
  %735 = vmatpush.msra.mxu0 %v85
  %736 = vmatpush.msra.mxu0 %v84
  %737 = vmatpush.msra.mxu0 %v83
  %738 = vmatpush.msra.mxu0 %v82
  %739 = vmatpush.msra.mxu0 %v81
  %740 = vmatpush.msra.mxu0 %v80
  %741 = vmatpush.msra.mxu0 %v79
  %742 = vmatpush.msra.mxu0 %v78
  %743 = vmatpush.msra.mxu0 %v77
  %744 = vmatpush.msra.mxu0 %v76
  %745 = vmatpush.msra.mxu0 %v75
  %746 = vmatpush.msra.mxu0 %v74
  %747 = vmatmul.f32.gmra.mxu0 %v669
  %v748 = vpop.f32.mrf.mxu0
  %v749 = vadd.f32 %v729, %v748
  %750 = vdwg.mxu0
  %751 = vmatpush.msra.mxu0 %v105
  %752 = vmatpush.msra.mxu0 %v104
  %753 = vmatpush.msra.mxu0 %v103
  %754 = vmatpush.msra.mxu0 %v102
  %755 = vmatpush.msra.mxu0 %v101
  %756 = vmatpush.msra.mxu0 %v100
  %757 = vmatpush.msra.mxu0 %v99
  %758 = vmatpush.msra.mxu0 %v98
  %759 = vmatpush.msra.mxu0 %v97
  %760 = vmatpush.msra.mxu0 %v96
  %761 = vmatpush.msra.mxu0 %v95
  %762 = vmatpush.msra.mxu0 %v94
  %763 = vmatpush.msra.mxu0 %v93
  %764 = vmatpush.msra.mxu0 %v92
  %765 = vmatpush.msra.mxu0 %v91
  %766 = vmatpush.msra.mxu0 %v90
  %767 = vmatmul.f32.gmra.mxu0 %v689
  %v768 = vpop.f32.mrf.mxu0
  %v769 = vadd.f32 %v749, %v768
  %770 = vdwg.mxu0
  %v771 = vmul.f32 %v769, %v769
  %v772 = vperm.slane %v41, 0
  %v773 = vmul.f32 %v769, %v772
  %774 = vadd.xlane.f32.xlu0 %v773
  %v775 = vpop.xlane.xlu0 %774
  %v776 = vmul.f32 %v775, 0.015625
  %v777 = vmul.f32 %v771, %v772
  %778 = vadd.xlane.f32.xlu0 %v777
  %v779 = vpop.xlane.xlu0 %778
  %v780 = vmul.f32 %v779, 0.015625
  %v781 = vmul.f32 %v776, %v776
  %v782 = vsub.f32 %v780, %v781
  %v783 = vmax.f32 %v782, 0.0
  %v784 = vadd.f32 %v783, 1e-05
  %v785 = vrsqrt.pop %v784
  %v786 = vmul.f32 %v785, %v784
  %v787 = vmul.f32 %v786, %v785
  %v788 = vmul.f32 0.5, %v787
  %v789 = vsub.f32 1.5, %v788
  %v790 = vmul.f32 %v785, %v789
  %vm791 = vweird.f32 %v784
  %vm792 = vweird.f32 %v785
  %vm793 = vmor %vm791, %vm792
  %v794 = vsel %vm793, %v785, %v790
  %v795 = vmul.f32 %v35, %v794
  %v796 = vmul.f32 %v776, %v795
  %798 = vrot.lane.b32.xlu0 %v796, 1
  %v799 = vpop.permute.xlu0 %798
  %v801 = vsub.f32 %v35, %v799
  %803 = vset.pattern.permute.xlu0 3
  %804 = vperm.xlu0 %803, %v795
  %v805 = vpop.permute.xlu0 %804
  %v807 = vmul.f32 %v805, %v772
  %v808 = vadd.f32 %v807, 0.0
  %810 = vset.pattern.permute.xlu0 4
  %811 = vperm.xlu0 %810, %v801
  %v812 = vpop.permute.xlu0 %811
  %v814 = vmul.f32 %v812, %v772
  %v815 = vadd.f32 %v814, 0.0
  %v816 = vperm.slane %v41, 1
  %v817 = vmul.f32 %v769, %v816
  %818 = vadd.xlane.f32.xlu0 %v817
  %v819 = vpop.xlane.xlu0 %818
  %v820 = vmul.f32 %v819, 0.015625
  %v821 = vmul.f32 %v771, %v816
  %822 = vadd.xlane.f32.xlu0 %v821
  %v823 = vpop.xlane.xlu0 %822
  %v824 = vmul.f32 %v823, 0.015625
  %v825 = vmul.f32 %v820, %v820
  %v826 = vsub.f32 %v824, %v825
  %v827 = vmax.f32 %v826, 0.0
  %v828 = vadd.f32 %v827, 1e-05
  %v829 = vrsqrt.pop %v828
  %v830 = vmul.f32 %v829, %v828
  %v831 = vmul.f32 %v830, %v829
  %v832 = vmul.f32 0.5, %v831
  %v833 = vsub.f32 1.5, %v832
  %v834 = vmul.f32 %v829, %v833
  %vm835 = vweird.f32 %v828
  %vm836 = vweird.f32 %v829
  %vm837 = vmor %vm835, %vm836
  %v838 = vsel %vm837, %v829, %v834
  %v839 = vmul.f32 %v35, %v838
  %v840 = vmul.f32 %v820, %v839
  %842 = vrot.lane.b32.xlu0 %v840, 1
  %v843 = vpop.permute.xlu0 %842
  %v845 = vsub.f32 %v35, %v843
  %847 = vset.pattern.permute.xlu0 3
  %848 = vperm.xlu0 %847, %v839
  %v849 = vpop.permute.xlu0 %848
  %v851 = vmul.f32 %v849, %v816
  %v852 = vadd.f32 %v808, %v851
  %854 = vset.pattern.permute.xlu0 4
  %855 = vperm.xlu0 %854, %v845
  %v856 = vpop.permute.xlu0 %855
  %v858 = vmul.f32 %v856, %v816
  %v859 = vadd.f32 %v815, %v858
  %v860 = vmul.f32 %v769, %v852
  %v861 = vadd.f32 %v860, %v859
  %vm862 = vcmp.ge.f32.partialorder %v861, 0.0
  %v863 = vmul.f32 %v861, 0.2
  %v864 = vsel %vm862, %v861, %v863
  %v865 = vld [vmem:[%s2] sm:$0xff]
  %866 = vrot.lane.b32.xlu0 %v864, 9
  %v867 = vpop.permute.xlu0 %866
  %v868 = vld [vmem:[%s6] sm:$0x1]
  %v869 = vperm.slane %v868, 0
  %v870 = vmul.f32 %v867, %v869
  %871 = vst [vmem:[#allocation3] sm:$0xff] %v870
  %872 = vrot.lane.b32.xlu0 %v864, 8
  %v873 = vpop.permute.xlu0 %872
  %v874 = vld [vmem:[%s6 + $0x1] sm:$0x1]
  %v875 = vperm.slane %v874, 0
  %v876 = vmul.f32 %v873, %v875
  %877 = vst [vmem:[#allocation3 + $0x8] sm:$0xff] %v876
  %878 = vrot.lane.b32.xlu0 %v864, 7
  %v879 = vpop.permute.xlu0 %878
  %v880 = vld [vmem:[%s6 + $0x2] sm:$0x1]
  %v881 = vperm.slane %v880, 0
  %v882 = vmul.f32 %v879, %v881
  %883 = vst [vmem:[#allocation3 + $0x10] sm:$0xff] %v882
  %884 = vrot.lane.b32.xlu0 %v864, 1
  %v885 = vpop.permute.xlu0 %884
  %v886 = vld [vmem:[%s6 + $0x3] sm:$0x1]
  %v887 = vperm.slane %v886, 0
  %v888 = vmul.f32 %v885, %v887
  %889 = vst [vmem:[#allocation3 + $0x18] sm:$0xff] %v888
  %v890 = vld [vmem:[%s6 + $0x4] sm:$0x1]
  %v891 = vperm.slane %v890, 0
  %v892 = vmul.f32 %v864, %v891
  %893 = vst [vmem:[#allocation3 + $0x20] sm:$0xff] %v892
  %894 = vrot.lane.b32.xlu0 %v864, 127
  %v895 = vpop.permute.xlu0 %894
  %v896 = vld [vmem:[%s6 + $0x5] sm:$0x1]
  %v897 = vperm.slane %v896, 0
  %v898 = vmul.f32 %v895, %v897
  %899 = vst [vmem:[#allocation3 + $0x28] sm:$0xff] %v898
  %900 = vrot.lane.b32.xlu0 %v864, 121
  %v901 = vpop.permute.xlu0 %900
  %v902 = vld [vmem:[%s6 + $0x6] sm:$0x1]
  %v903 = vperm.slane %v902, 0
  %v904 = vmul.f32 %v901, %v903
  %905 = vst [vmem:[#allocation3 + $0x30] sm:$0xff] %v904
  %906 = vrot.lane.b32.xlu0 %v864, 120
  %v907 = vpop.permute.xlu0 %906
  %v908 = vld [vmem:[%s6 + $0x7] sm:$0x1]
  %v909 = vperm.slane %v908, 0
  %v910 = vmul.f32 %v907, %v909
  %911 = vst [vmem:[#allocation3 + $0x38] sm:$0xff] %v910
  %912 = vrot.lane.b32.xlu0 %v864, 119
  %v913 = vpop.permute.xlu0 %912
  %v914 = vld [vmem:[%s6 + $0x8] sm:$0x1]
  %v915 = vperm.slane %v914, 0
  %v916 = vmul.f32 %v913, %v915
  %917 = vst [vmem:[#allocation3 + $0x40] sm:$0xff] %v916
  %v918 = vld [vmem:[#allocation3] sm:$0xff]
  %v919 = vld [vmem:[#allocation3 + $0x8] sm:$0xff]
  %v920 = vld [vmem:[#allocation3 + $0x10] sm:$0xff]
  %v921 = vld [vmem:[#allocation3 + $0x18] sm:$0xff]
  %v922 = vld [vmem:[#allocation3 + $0x20] sm:$0xff]
  %v923 = vld [vmem:[#allocation3 + $0x28] sm:$0xff]
  %v924 = vld [vmem:[#allocation3 + $0x30] sm:$0xff]
  %v925 = vld [vmem:[#allocation3 + $0x38] sm:$0xff]
  %v926 = vld [vmem:[#allocation3 + $0x40] sm:$0xff]
  %927 = vset.pattern.permute.xlu0 5
  %928 = vperm.xlu0 %927, %v35
  %v929 = vpop.permute.xlu0 %928
  %v932 = vsel %vm607, %v865, 0
  %934 = vmatpush.msra.mxu0 0.0
  %935 = vmatpush.msra.mxu0 0.0
  %936 = vmatpush.msra.mxu0 0.0
  %937 = vmatpush.msra.mxu0 0.0
  %938 = vmatpush.msra.mxu0 0.0
  %939 = vmatpush.msra.mxu0 0.0
  %940 = vmatpush.msra.mxu0 0.0
  %941 = vmatpush.msra.mxu0 %v926
  %942 = vmatpush.msra.mxu0 %v925
  %943 = vmatpush.msra.mxu0 %v924
  %944 = vmatpush.msra.mxu0 %v923
  %945 = vmatpush.msra.mxu0 %v922
  %946 = vmatpush.msra.mxu0 %v921
  %947 = vmatpush.msra.mxu0 %v920
  %948 = vmatpush.msra.mxu0 %v919
  %949 = vmatpush.msra.mxu0 %v918
  %950 = vmatmul.f32.gmra.mxu0 %v932
  %v951 = vpop.f32.mrf.mxu0
  %v952 = vadd.f32 %v929, %v951
  %953 = vdwg.mxu0
  %954 = vmatpush.msra.mxu0 %v57
  %955 = vmatpush.msra.mxu0 %v56
  %956 = vmatpush.msra.mxu0 %v55
  %957 = vmatpush.msra.mxu0 %v54
  %958 = vmatpush.msra.mxu0 %v53
  %959 = vmatpush.msra.mxu0 %v52
  %960 = vmatpush.msra.mxu0 %v51
  %961 = vmatpush.msra.mxu0 %v50
  %962 = vmatpush.msra.mxu0 %v49
  %963 = vmatpush.msra.mxu0 %v48
  %964 = vmatpush.msra.mxu0 %v47
  %965 = vmatpush.msra.mxu0 %v46
  %966 = vmatpush.msra.mxu0 %v45
  %967 = vmatpush.msra.mxu0 %v44
  %968 = vmatpush.msra.mxu0 %v43
  %969 = vmatpush.msra.mxu0 %v42
  %970 = vmatmul.f32.gmra.mxu0 %v36
  %v971 = vpop.f32.mrf.mxu0
  %v972 = vadd.f32 0.0, %v971
  %973 = vdwg.mxu0
  %974 = vmatpush.msra.mxu0 %v73
  %975 = vmatpush.msra.mxu0 %v72
  %976 = vmatpush.msra.mxu0 %v71
  %977 = vmatpush.msra.mxu0 %v70
  %978 = vmatpush.msra.mxu0 %v69
  %979 = vmatpush.msra.mxu0 %v68
  %980 = vmatpush.msra.mxu0 %v67
  %981 = vmatpush.msra.mxu0 %v66
  %982 = vmatpush.msra.mxu0 %v65
  %983 = vmatpush.msra.mxu0 %v64
  %984 = vmatpush.msra.mxu0 %v63
  %985 = vmatpush.msra.mxu0 %v62
  %986 = vmatpush.msra.mxu0 %v61
  %987 = vmatpush.msra.mxu0 %v60
  %988 = vmatpush.msra.mxu0 %v59
  %989 = vmatpush.msra.mxu0 %v58
  %990 = vmatmul.f32.gmra.mxu0 %v37
  %v991 = vpop.f32.mrf.mxu0
  %v992 = vadd.f32 %v972, %v991
  %993 = vdwg.mxu0
  %994 = vmatpush.msra.mxu0 %v89
  %995 = vmatpush.msra.mxu0 %v88
  %996 = vmatpush.msra.mxu0 %v87
  %997 = vmatpush.msra.mxu0 %v86
  %998 = vmatpush.msra.mxu0 %v85
  %999 = vmatpush.msra.mxu0 %v84
  %1000 = vmatpush.msra.mxu0 %v83
  %1001 = vmatpush.msra.mxu0 %v82
  %1002 = vmatpush.msra.mxu0 %v81
  %1003 = vmatpush.msra.mxu0 %v80
  %1004 = vmatpush.msra.mxu0 %v79
  %1005 = vmatpush.msra.mxu0 %v78
  %1006 = vmatpush.msra.mxu0 %v77
  %1007 = vmatpush.msra.mxu0 %v76
  %1008 = vmatpush.msra.mxu0 %v75
  %1009 = vmatpush.msra.mxu0 %v74
  %1010 = vmatmul.f32.gmra.mxu0 %v38
  %v1011 = vpop.f32.mrf.mxu0
  %v1012 = vadd.f32 %v992, %v1011
  %1013 = vdwg.mxu0
  %1014 = vmatpush.msra.mxu0 %v105
  %1015 = vmatpush.msra.mxu0 %v104
  %1016 = vmatpush.msra.mxu0 %v103
  %1017 = vmatpush.msra.mxu0 %v102
  %1018 = vmatpush.msra.mxu0 %v101
  %1019 = vmatpush.msra.mxu0 %v100
  %1020 = vmatpush.msra.mxu0 %v99
  %1021 = vmatpush.msra.mxu0 %v98
  %1022 = vmatpush.msra.mxu0 %v97
  %1023 = vmatpush.msra.mxu0 %v96
  %1024 = vmatpush.msra.mxu0 %v95
  %1025 = vmatpush.msra.mxu0 %v94
  %1026 = vmatpush.msra.mxu0 %v93
  %1027 = vmatpush.msra.mxu0 %v92
  %1028 = vmatpush.msra.mxu0 %v91
  %1029 = vmatpush.msra.mxu0 %v90
  %1030 = vmatmul.f32.gmra.mxu0 %v39
  %v1031 = vpop.f32.mrf.mxu0
  %v1032 = vadd.f32 %v1012, %v1031
  %1033 = vdwg.mxu0
  %v1034 = vld [vmem:[%s3] sm:$0xff]
  %vm1035 = vcmask 64512
  %v1037 = vsel %vm1035, %v1034, 0
  %1039 = vmatpush.msra.mxu0 0.0
  %1040 = vmatpush.msra.mxu0 0.0
  %1041 = vmatpush.msra.mxu0 0.0
  %1042 = vmatpush.msra.mxu0 0.0
  %1043 = vmatpush.msra.mxu0 0.0
  %1044 = vmatpush.msra.mxu0 0.0
  %1045 = vmatpush.msra.mxu0 0.0
  %1046 = vmatpush.msra.mxu0 0.0
  %1047 = vmatpush.msra.mxu0 0.0
  %1048 = vmatpush.msra.mxu0 0.0
  %1049 = vmatpush.msra.mxu0 0.0
  %1050 = vmatpush.msra.mxu0 0.0
  %1051 = vmatpush.msra.mxu0 0.0
  %1052 = vmatpush.msra.mxu0 0.0
  %1053 = vmatpush.msra.mxu0 0.0
  %1054 = vmatpush.msra.mxu0 %v1032
  %1055 = vmatmul.f32.gmra.mxu0 %v1037
  %v1056 = vpop.f32.mrf.mxu0
  %v1057 = vadd.f32 0.0, %v1056
  %1058 = vdwg.mxu0
  %v1059 = vadd.f32 %v952, %v1057
  %v1060 = vmul.f32 %v1059, 0.70710677
  %1061 = vst [vmem:[%s10] sm:$0xff] %v1060
  // Predicated region
  $region42: #{resblk_forward.1} parent=0 // pred_check
    _
  $region43: #{resblk_forward.1} parent=0 // pred_check_branch
    %1063 = sbr.rel (0) target = $region45
  $region44: #{resblk_forward.1} parent=0 // pred_region
    _
  $region45: #{resblk_forward.1} parent=0 // pred_fallthru
    _
  // Predicated region
  $region46: #{resblk_forward.1} parent=0 // pred_check
    _
  $region47: #{resblk_forward.1} parent=0 // pred_check_branch
    %1065 = sbr.rel (0) target = $region49
  $region48: #{resblk_forward.1} parent=0 // pred_region
    _
  $region49: #{resblk_forward.1} parent=0 // pred_fallthru
    _

</llo_original>
